<compile_context>
chip_gen: v6e
topology: v6e:2x2x1
jax: 0.10.0
libtpu: 0.0.40
codegen_flags: <defaults>
</compile_context>

<pallas_src>
import jax
import jax.numpy as jnp
from jax.experimental import pallas as pl
from jax.experimental.pallas import tpu as pltpu


def _round_up(n, m):
    return ((n + m - 1) // m) * m


def _rnn_kernel(x_ref, lens_ref,
                wi3_ref, bi3_ref, wh3_ref, bh3_ref,
                wlin_ref, blin_ref, wdec_ref,
                logits_ref, hfin_ref,
                xg_scr, hseq_scr):
    f32, bf16 = jnp.float32, jnp.bfloat16
    B_pad, Hp = hfin_ref.shape
    T = xg_scr.shape[0] // B_pad
    chunk_rows = logits_ref.shape[0]
    i = pl.program_id(0)

    # ---- grid step 0: phase 1 (batched input projection) + phase 2 (serial recurrence) ----
    @pl.when(i == 0)
    def _():
        # one (T*B_pad, Din) x (Din, 3*Hp) GEMM for ALL timesteps; stored bf16
        xg_scr[...] = (jnp.dot(x_ref[...], wi3_ref[...], preferred_element_type=f32)
                       + bi3_ref[...]).astype(bf16)

        wh3 = wh3_ref[...]        # (Hp, 3*Hp) bf16, loop-invariant
        bh3 = bh3_ref[...]        # (1, 3*Hp) f32
        # lengths broadcast once, hoisted out of the serial loop
        len_b = jnp.broadcast_to(lens_ref[...], (B_pad, Hp))   # int32

        # TODO(synk): hold wh3 in MXU weight staging across the loop
        # (pltpu.matmul_push_rhs / matmul_acc_lhs / matmul_pop) instead of re-pushing the
        # loop-invariant RHS through jnp.dot every timestep.
        def step(t, h):
            off = pl.multiple_of(t * B_pad, B_pad)
            xg_t = xg_scr[pl.ds(off, B_pad), :].astype(f32)     # (B_pad, 3*Hp)
            hg = jnp.dot(h.astype(bf16), wh3, preferred_element_type=f32) + bh3
            # PyTorch GRU gate equations; gate blocks 128-lane aligned (r | z | n)
            r = jax.nn.sigmoid(xg_t[:, :Hp] + hg[:, :Hp])
            z = jax.nn.sigmoid(xg_t[:, Hp:2 * Hp] + hg[:, Hp:2 * Hp])
            n = jnp.tanh(xg_t[:, 2 * Hp:] + r * hg[:, 2 * Hp:])
            h_new = (1.0 - z) * n + z * h
            # packed-sequence semantics: freeze hidden past each sequence's length and
            # zero the unpacked GRU output there (one compare + two selects per step).
            valid = t < len_b
            h_next = jnp.where(valid, h_new, h)
            hseq_scr[pl.ds(off, B_pad), :] = jnp.where(valid, h_next, 0.0).astype(bf16)
            return h_next

        h_fin = jax.lax.fori_loop(0, T, step, jnp.zeros((B_pad, Hp), f32),
                                  unroll=min(T, 8))   # capped unroll (i-mem / vreg pressure)
        hfin_ref[...] = h_fin          # final hidden written once, after the loop

    # ---- every grid step: phase 3 (tanh(Linear) + tied decoder) for one row chunk ----
    # Streams (chunk_rows, Vp) logits tiles: the full logits slab never sits in VMEM and
    # writeback of chunk i-1 overlaps the GEMMs of chunk i.
    # TODO(synk): on v6e/v7x, interleave these chunks into the recurrence loop body to hide
    # phase 3 behind the latency-bound serial GRU step; on v7x also split batch across the
    # two TensorCores (CORE_PARALLEL / pl.core_map).
    row0 = pl.multiple_of(i * chunk_rows, chunk_rows)
    hrows = hseq_scr[pl.ds(row0, chunk_rows), :]                 # (chunk_rows, Hp) bf16
    lin = jnp.tanh(jnp.dot(hrows, wlin_ref[...], preferred_element_type=f32)
                   + blin_ref[...])
    # TODO(synk): emit bf16 logits (halves HBM writeback) if the downstream loss tolerates it.
    logits_ref[...] = jnp.dot(lin.astype(bf16), wdec_ref[...],
                              preferred_element_type=f32)        # lane-dense (Vp = k*128)


def _gate_block_pad(w, H, Hp):
    """(rows, 3H) -> (rows, 3Hp): each GRU gate block (r|z|n) placed at a 128-lane-aligned
    column offset g*Hp; padding columns are zero."""
    rows = w.shape[0]
    out = jnp.zeros((rows, 3 * Hp), w.dtype)
    for g in range(3):
        out = out.at[:, g * Hp:g * Hp + H].set(w[:, g * H:(g + 1) * H])
    return out


def my_rnn_forward(char_ids, lang_ids, lengths, params, *,
                   t_chunk=None, logits_chunk_budget_bytes=4 << 20):
    f32, bf16 = jnp.float32, jnp.bfloat16
    W_char = params["char_emb"]   # (V, C)
    W_lang = params["lang_emb"]   # (L, E)
    T, B = char_ids.shape
    V, C = W_char.shape
    H = params["w_hh"].shape[1]
    Din = C + W_lang.shape[1]

    B_pad = _round_up(B, 8)       # sublane-aligned batch
    Hp = _round_up(H, 128)        # lane-aligned hidden width (gate blocks on vreg tiles)
    Cp = _round_up(C, 128)        # lane-aligned Linear width
    Vp = _round_up(V, 128)        # lane-dense vocab for the logits store

    # embeddings + concat (plain-JAX gather glue), padded batch, time-major flatten
    x = jnp.concatenate(
        [jnp.take(W_char, char_ids, axis=0),
         jnp.take(W_lang, lang_ids, axis=0)], axis=-1).astype(f32)        # (T, B, Din)
    x_p = jnp.zeros((T, B_pad, Din), f32).at[:, :B, :].set(x)
    x_flat = x_p.reshape(T * B_pad, Din).astype(bf16)                     # (T*B_pad, Din)

    # per-row lengths (padded batch rows get length 0); validity mask is built in-kernel
    lens_p = jnp.zeros((B_pad,), jnp.int32).at[:B].set(lengths.astype(jnp.int32))
    lens_2d = lens_p.reshape(B_pad, 1)

    # fused, gate-block-aligned GRU weights (PyTorch gate order r, z, n)
    wi3 = _gate_block_pad(params["w_ih"].T, H, Hp).astype(bf16)           # (Din, 3*Hp)
    wh3 = jnp.zeros((Hp, 3 * Hp), f32).at[:H, :].set(
        _gate_block_pad(params["w_hh"].T, H, Hp)).astype(bf16)            # (Hp, 3*Hp)
    bi3 = _gate_block_pad(params["b_ih"].reshape(1, 3 * H), H, Hp).astype(f32)
    bh3 = _gate_block_pad(params["b_hh"].reshape(1, 3 * H), H, Hp).astype(f32)
    wlin = jnp.zeros((Hp, Cp), f32).at[:H, :C].set(params["w_lin"].T).astype(bf16)
    blin = jnp.zeros((1, Cp), f32).at[0, :C].set(params["b_lin"])
    # decoder weight tied to char_encoder, bias zeroed; padded to 128 lanes
    wdec = jnp.zeros((Cp, Vp), f32).at[:C, :V].set(W_char.T).astype(bf16)

    weights = (wi3, bi3, wh3, bh3, wlin, blin, wdec)

    # phase-3 streaming: biggest t-chunk (dividing T) whose f32 logits tile fits the budget
    if t_chunk is None:
        fitting = [d for d in range(1, T + 1)
                   if T % d == 0 and d * B_pad * Vp * 4 <= logits_chunk_budget_bytes]
        t_chunk = max(fitting) if fitting else 1
    assert T % t_chunk == 0
    n_chunks = T // t_chunk
    chunk_rows = t_chunk * B_pad

    def _full_spec(shape):
        nd = len(shape)
        return pl.BlockSpec(tuple(shape), lambda i, _nd=nd: (0,) * _nd)

    logits_p, hfin = pl.pallas_call(
        _rnn_kernel,
        out_shape=(jax.ShapeDtypeStruct((T * B_pad, Vp), f32),
                   jax.ShapeDtypeStruct((B_pad, Hp), f32)),
        grid_spec=pltpu.PrefetchScalarGridSpec(
            num_scalar_prefetch=0,
            grid=(n_chunks,),                       # phase-3 row chunks; recurrence at i==0
            in_specs=[_full_spec(a.shape) for a in (x_flat, lens_2d) + weights],
            out_specs=[pl.BlockSpec((chunk_rows, Vp), lambda i: (i, 0)),
                       pl.BlockSpec((B_pad, Hp), lambda i: (0, 0))],
            scratch_shapes=[pltpu.VMEM((T * B_pad, 3 * Hp), bf16),   # xg (input projection)
                            pltpu.VMEM((T * B_pad, Hp), bf16)]),     # masked hidden sequence
        compiler_params=pltpu.CompilerParams(
            dimension_semantics=("arbitrary",)),
        # TODO(synk): at production sizes set vmem_limit_bytes and re-derive t_chunk per chip
        # (16/32 MiB scoped defaults, 64 MiB physical on v7x) and add a core-parallel batch
        # split for v7x's two TensorCores.
    )(x_flat, lens_2d, *weights)

    logits = logits_p.reshape(T, B_pad, Vp)[:, :B, :V]     # (T, B, V)
    hidden_t = hfin[None, :B, :H]                          # (1, B, H)
    aux = (x_flat, lens_p, weights, T, B_pad, Hp)
    return logits, hidden_t, aux


def _ref_forward(x_flat, lens_p, weights, T, B_pad, Hp):
    """Pure-JAX reference of the exact same padded / bf16-stored math as the kernel."""
    wi3, bi3, wh3, bh3, wlin, blin, wdec = weights
    f32, bf16 = jnp.float32, jnp.bfloat16
    xg = (jnp.dot(x_flat, wi3, preferred_element_type=f32) + bi3).astype(bf16)
    xg = xg.reshape(T, B_pad, 3 * Hp)
    len_b = jnp.broadcast_to(lens_p[:, None], (B_pad, Hp))

    def step(carry, xg_t):
        h, t = carry
        xg_t = xg_t.astype(f32)
        hg = jnp.dot(h.astype(bf16), wh3, preferred_element_type=f32) + bh3
        r = jax.nn.sigmoid(xg_t[:, :Hp] + hg[:, :Hp])
        z = jax.nn.sigmoid(xg_t[:, Hp:2 * Hp] + hg[:, Hp:2 * Hp])
        n = jnp.tanh(xg_t[:, 2 * Hp:] + r * hg[:, 2 * Hp:])
        h_new = (1.0 - z) * n + z * h
        valid = t < len_b
        h_next = jnp.where(valid, h_new, h)
        out = jnp.where(valid, h_next, 0.0).astype(bf16)
        return (h_next, t + 1), out

    h0 = jnp.zeros((B_pad, Hp), f32)
    (hT, _), hseq = jax.lax.scan(step, (h0, jnp.int32(0)), xg)
    hseq = hseq.reshape(T * B_pad, Hp)
    lin = jnp.tanh(jnp.dot(hseq, wlin, preferred_element_type=f32) + blin)
    logits_p = jnp.dot(lin.astype(bf16), wdec, preferred_element_type=f32)
    return logits_p, hT


def init_params(key, vocab_size, lang_size, char_vec_size, lang_vec_size, hidden_size):
    ks = jax.random.split(key, 8)
    kgru = 1.0 / jnp.sqrt(hidden_size)
    klin = 1.0 / jnp.sqrt(hidden_size)
    din = char_vec_size + lang_vec_size
    return {
        "char_emb": jax.random.normal(ks[0], (vocab_size, char_vec_size), jnp.float32),
        "lang_emb": jax.random.normal(ks[1], (lang_size, lang_vec_size), jnp.float32),
        "w_ih": jax.random.uniform(ks[2], (3 * hidden_size, din), jnp.float32, -kgru, kgru),
        "w_hh": jax.random.uniform(ks[3], (3 * hidden_size, hidden_size), jnp.float32, -kgru, kgru),
        "b_ih": jax.random.uniform(ks[4], (3 * hidden_size,), jnp.float32, -kgru, kgru),
        "b_hh": jax.random.uniform(ks[5], (3 * hidden_size,), jnp.float32, -kgru, kgru),
        "w_lin": jax.random.uniform(ks[6], (char_vec_size, hidden_size), jnp.float32, -klin, klin),
        "b_lin": jax.random.uniform(ks[7], (char_vec_size,), jnp.float32, -klin, klin),
        # decoder.weight is tied to char_emb; decoder.bias is zeroed in __init__.
    }


if __name__ == "__main__":
    VOCAB, LANGS, CVEC, LVEC, HID = 40, 9, 12, 2, 50
    T, B = 8, 4

    key = jax.random.PRNGKey(0)
    kp, kc, kl = jax.random.split(key, 3)
    params = init_params(kp, VOCAB, LANGS, CVEC, LVEC, HID)

    char_ids = jax.random.randint(kc, (T, B), 0, VOCAB, dtype=jnp.int32)   # input[0]
    lang_ids = jax.random.randint(kl, (T, B), 0, LANGS, dtype=jnp.int32)   # input[1]
    lengths = jnp.array([8, 7, 5, 3], dtype=jnp.int32)                     # input[2]

    # t_chunk=4 -> two streamed phase-3 chunks, exercising the tiled-logits path at toy size
    logits, hidden_t, (x_flat, lens_p, weights, Tn, B_pad, Hp) = my_rnn_forward(
        char_ids, lang_ids, lengths, params, t_chunk=4)
    jax.block_until_ready(logits)
    jax.block_until_ready(hidden_t)

    # correctness check against a pure-JAX reference of the same math / dtypes
    ref_logits_p, ref_hT = _ref_forward(x_flat, lens_p, weights, Tn, B_pad, Hp)
    Vp = weights[-1].shape[1]
    ref_logits = ref_logits_p.reshape(Tn, B_pad, Vp)[:, :B, :VOCAB]
    ref_hidden = ref_hT[None, :B, :HID]

    assert logits.shape == (T, B, VOCAB) and hidden_t.shape == (1, B, HID)
    assert jnp.allclose(logits, ref_logits, atol=2e-3, rtol=2e-3), "logits mismatch"
    assert jnp.allclose(hidden_t, ref_hidden, atol=2e-3, rtol=2e-3), "hidden mismatch"

    print("KERNEL_OK")
</pallas_src>

<mosaic_0001>
module attributes {stable_mosaic.version = 11 : i64} {
  func.func @_rnn_kernel(%arg0: i32, %arg1: memref<64x14xbf16, #tpu.memory_space<vmem>>, %arg2: memref<8x1xi32, #tpu.memory_space<vmem>>, %arg3: memref<14x384xbf16, #tpu.memory_space<vmem>>, %arg4: memref<1x384xf32, #tpu.memory_space<vmem>>, %arg5: memref<128x384xbf16, #tpu.memory_space<vmem>>, %arg6: memref<1x384xf32, #tpu.memory_space<vmem>>, %arg7: memref<128x128xbf16, #tpu.memory_space<vmem>>, %arg8: memref<1x128xf32, #tpu.memory_space<vmem>>, %arg9: memref<128x128xbf16, #tpu.memory_space<vmem>>, %arg10: memref<32x128xf32, #tpu.memory_space<vmem>>, %arg11: memref<8x128xf32, #tpu.memory_space<vmem>>, %arg12: memref<64x384xbf16, #tpu.memory_space<vmem>>, %arg13: memref<64x128xbf16, #tpu.memory_space<vmem>>) attributes {dimension_semantics = [#tpu.dimension_semantics<arbitrary>], iteration_bounds = array<i64: 2>, scalar_prefetch = 0 : i64, scratch_operands = 2 : i64, tpu.core_type = #tpu.core_type<tc>, window_params = [{pipeline_mode = #tpu.pipeline_mode<synchronous>, transform_indices = @transform_0, window_bounds = array<i64: 64, 14>}, {pipeline_mode = #tpu.pipeline_mode<synchronous>, transform_indices = @transform_1, window_bounds = array<i64: 8, 1>}, {pipeline_mode = #tpu.pipeline_mode<synchronous>, transform_indices = @transform_2, window_bounds = array<i64: 14, 384>}, {pipeline_mode = #tpu.pipeline_mode<synchronous>, transform_indices = @transform_3, window_bounds = array<i64: 1, 384>}, {pipeline_mode = #tpu.pipeline_mode<synchronous>, transform_indices = @transform_4, window_bounds = array<i64: 128, 384>}, {pipeline_mode = #tpu.pipeline_mode<synchronous>, transform_indices = @transform_5, window_bounds = array<i64: 1, 384>}, {pipeline_mode = #tpu.pipeline_mode<synchronous>, transform_indices = @transform_6, window_bounds = array<i64: 128, 128>}, {pipeline_mode = #tpu.pipeline_mode<synchronous>, transform_indices = @transform_7, window_bounds = array<i64: 1, 128>}, {pipeline_mode = #tpu.pipeline_mode<synchronous>, transform_indices = @transform_8, window_bounds = array<i64: 128, 128>}, {transform_indices = @transform_9, window_bounds = array<i64: 32, 128>}, {pipeline_mode = #tpu.pipeline_mode<synchronous>, transform_indices = @transform_10, window_bounds = array<i64: 8, 128>}]} {
    %c0_i32 = arith.constant 0 : i32
    %0 = arith.cmpi eq, %arg0, %c0_i32 : i32
    %1 = arith.extui %0 : i1 to i32
    %c0_i32_0 = arith.constant 0 : i32
    %2 = arith.cmpi ne, %1, %c0_i32_0 : i32
    scf.if %2 {
      %c0_10 = arith.constant 0 : index
      %c0_11 = arith.constant 0 : index
      %17 = vector.load %arg1[%c0_10, %c0_11] : memref<64x14xbf16, #tpu.memory_space<vmem>>, vector<64x14xbf16>
      %c0_12 = arith.constant 0 : index
      %c0_13 = arith.constant 0 : index
      %18 = vector.load %arg3[%c0_12, %c0_13] : memref<14x384xbf16, #tpu.memory_space<vmem>>, vector<14x384xbf16>
      %cst_14 = arith.constant dense<0.000000e+00> : vector<64x384xf32>
      %19 = tpu.matmul %17, %18, %cst_14 {dimension_numbers = #tpu.dot_dimension_numbers<[1], [0], [0], [1], [0, 0, 1, 1], [], []>} : vector<64x14xbf16>, vector<14x384xbf16>, vector<64x384xf32> -> vector<64x384xf32>
      %c0_15 = arith.constant 0 : index
      %c0_16 = arith.constant 0 : index
      %20 = vector.load %arg4[%c0_15, %c0_16] : memref<1x384xf32, #tpu.memory_space<vmem>>, vector<1x384xf32>
      %21 = vector.broadcast %20 : vector<1x384xf32> to vector<64x384xf32>
      %22 = arith.addf %19, %21 : vector<64x384xf32>
      %23 = arith.truncf %22 : vector<64x384xf32> to vector<64x384xbf16>
      %c0_17 = arith.constant 0 : index
      %c0_18 = arith.constant 0 : index
      %24 = vector.load %arg12[%c0_17, %c0_18] : memref<64x384xbf16, #tpu.memory_space<vmem>>, vector<64x384xbf16>
      tpu.vector_store %arg12[%c0_17, %c0_18], %23 {strides = array<i32>} : memref<64x384xbf16, #tpu.memory_space<vmem>>, vector<64x384xbf16>,
      %c0_19 = arith.constant 0 : index
      %c0_20 = arith.constant 0 : index
      %25 = vector.load %arg5[%c0_19, %c0_20] : memref<128x384xbf16, #tpu.memory_space<vmem>>, vector<128x384xbf16>
      %c0_21 = arith.constant 0 : index
      %c0_22 = arith.constant 0 : index
      %26 = vector.load %arg6[%c0_21, %c0_22] : memref<1x384xf32, #tpu.memory_space<vmem>>, vector<1x384xf32>
      %c0_23 = arith.constant 0 : index
      %c0_24 = arith.constant 0 : index
      %27 = vector.load %arg2[%c0_23, %c0_24] : memref<8x1xi32, #tpu.memory_space<vmem>>, vector<8x1xi32>
      %28 = vector.shape_cast %27 : vector<8x1xi32> to vector<8x1xi32>
      %29 = vector.broadcast %28 : vector<8x1xi32> to vector<8x128xi32>
      %cst_25 = arith.constant 0.000000e+00 : f32
      %30 = vector.broadcast %cst_25 : f32 to vector<8x128xf32>
      %c0_i32_26 = arith.constant 0 : i32
      %c8_i32 = arith.constant 8 : i32
      %31 = arith.muli %c0_i32_26, %c8_i32 : i32
      %32 = tpu.assume_multiple %31, 8 : i32
      %33 = arith.index_cast %32 : i32 to index
      %c0_27 = arith.constant 0 : index
      %34 = vector.load %arg12[%33, %c0_27] : memref<64x384xbf16, #tpu.memory_space<vmem>>, vector<8x384xbf16>
      %35 = arith.extf %34 : vector<8x384xbf16> to vector<8x384xf32>
      %36 = arith.truncf %30 : vector<8x128xf32> to vector<8x128xbf16>
      %cst_28 = arith.constant dense<0.000000e+00> : vector<8x384xf32>
      %37 = tpu.matmul %36, %25, %cst_28 {dimension_numbers = #tpu.dot_dimension_numbers<[1], [0], [0], [1], [0, 0, 1, 1], [], []>} : vector<8x128xbf16>, vector<128x384xbf16>, vector<8x384xf32> -> vector<8x384xf32>
      %38 = vector.broadcast %26 : vector<1x384xf32> to vector<8x384xf32>
      %39 = arith.addf %37, %38 : vector<8x384xf32>
      %40 = vector.extract_strided_slice %35 {offsets = [0, 0], sizes = [8, 128], strides = [1, 1]} : vector<8x384xf32> to vector<8x128xf32>
      %41 = vector.extract_strided_slice %39 {offsets = [0, 0], sizes = [8, 128], strides = [1, 1]} : vector<8x384xf32> to vector<8x128xf32>
      %42 = arith.addf %40, %41 : vector<8x128xf32>
      %43 = arith.negf %42 : vector<8x128xf32>
      %44 = math.exp %43 : vector<8x128xf32>
      %cst_29 = arith.constant 1.000000e+00 : f32
      %45 = vector.broadcast %cst_29 : f32 to vector<8x128xf32>
      %46 = arith.addf %45, %44 : vector<8x128xf32>
      %47 = arith.divf %45, %46 : vector<8x128xf32>
      %48 = vector.extract_strided_slice %35 {offsets = [0, 128], sizes = [8, 128], strides = [1, 1]} : vector<8x384xf32> to vector<8x128xf32>
      %49 = vector.extract_strided_slice %39 {offsets = [0, 128], sizes = [8, 128], strides = [1, 1]} : vector<8x384xf32> to vector<8x128xf32>
      %50 = arith.addf %48, %49 : vector<8x128xf32>
      %51 = arith.negf %50 : vector<8x128xf32>
      %52 = math.exp %51 : vector<8x128xf32>
      %cst_30 = arith.constant 1.000000e+00 : f32
      %53 = vector.broadcast %cst_30 : f32 to vector<8x128xf32>
      %54 = arith.addf %53, %52 : vector<8x128xf32>
      %55 = arith.divf %53, %54 : vector<8x128xf32>
      %56 = vector.extract_strided_slice %35 {offsets = [0, 256], sizes = [8, 128], strides = [1, 1]} : vector<8x384xf32> to vector<8x128xf32>
      %57 = vector.extract_strided_slice %39 {offsets = [0, 256], sizes = [8, 128], strides = [1, 1]} : vector<8x384xf32> to vector<8x128xf32>
      %58 = arith.mulf %47, %57 : vector<8x128xf32>
      %59 = arith.addf %56, %58 : vector<8x128xf32>
      %60 = math.tanh %59 : vector<8x128xf32>
      %cst_31 = arith.constant 1.000000e+00 : f32
      %61 = vector.broadcast %cst_31 : f32 to vector<8x128xf32>
      %62 = arith.subf %61, %55 : vector<8x128xf32>
      %63 = arith.mulf %62, %60 : vector<8x128xf32>
      %64 = arith.mulf %55, %30 : vector<8x128xf32>
      %65 = arith.addf %63, %64 : vector<8x128xf32>
      %66 = vector.broadcast %c0_i32_26 : i32 to vector<8x128xi32>
      %67 = arith.cmpi slt, %66, %29 : vector<8x128xi32>
      %68 = arith.select %67, %65, %30 : vector<8x128xi1>, vector<8x128xf32>
      %cst_32 = arith.constant 0.000000e+00 : f32
      %69 = vector.broadcast %cst_32 : f32 to vector<8x128xf32>
      %70 = arith.select %67, %68, %69 : vector<8x128xi1>, vector<8x128xf32>
      %71 = arith.truncf %70 : vector<8x128xf32> to vector<8x128xbf16>
      %72 = arith.index_cast %32 : i32 to index
      %c0_33 = arith.constant 0 : index
      %73 = vector.load %arg13[%72, %c0_33] : memref<64x128xbf16, #tpu.memory_space<vmem>>, vector<8x128xbf16>
      tpu.vector_store %arg13[%72, %c0_33], %71 {strides = array<i32>} : memref<64x128xbf16, #tpu.memory_space<vmem>>, vector<8x128xbf16>,
      %c1_i32 = arith.constant 1 : i32
      %c8_i32_34 = arith.constant 8 : i32
      %74 = arith.muli %c1_i32, %c8_i32_34 : i32
      %75 = tpu.assume_multiple %74, 8 : i32
      %76 = arith.index_cast %75 : i32 to index
      %c0_35 = arith.constant 0 : index
      %77 = vector.load %arg12[%76, %c0_35] : memref<64x384xbf16, #tpu.memory_space<vmem>>, vector<8x384xbf16>
      %78 = arith.extf %77 : vector<8x384xbf16> to vector<8x384xf32>
      %79 = arith.truncf %68 : vector<8x128xf32> to vector<8x128xbf16>
      %cst_36 = arith.constant dense<0.000000e+00> : vector<8x384xf32>
      %80 = tpu.matmul %79, %25, %cst_36 {dimension_numbers = #tpu.dot_dimension_numbers<[1], [0], [0], [1], [0, 0, 1, 1], [], []>} : vector<8x128xbf16>, vector<128x384xbf16>, vector<8x384xf32> -> vector<8x384xf32>
      %81 = vector.broadcast %26 : vector<1x384xf32> to vector<8x384xf32>
      %82 = arith.addf %80, %81 : vector<8x384xf32>
      %83 = vector.extract_strided_slice %78 {offsets = [0, 0], sizes = [8, 128], strides = [1, 1]} : vector<8x384xf32> to vector<8x128xf32>
      %84 = vector.extract_strided_slice %82 {offsets = [0, 0], sizes = [8, 128], strides = [1, 1]} : vector<8x384xf32> to vector<8x128xf32>
      %85 = arith.addf %83, %84 : vector<8x128xf32>
      %86 = arith.negf %85 : vector<8x128xf32>
      %87 = math.exp %86 : vector<8x128xf32>
      %cst_37 = arith.constant 1.000000e+00 : f32
      %88 = vector.broadcast %cst_37 : f32 to vector<8x128xf32>
      %89 = arith.addf %88, %87 : vector<8x128xf32>
      %90 = arith.divf %88, %89 : vector<8x128xf32>
      %91 = vector.extract_strided_slice %78 {offsets = [0, 128], sizes = [8, 128], strides = [1, 1]} : vector<8x384xf32> to vector<8x128xf32>
      %92 = vector.extract_strided_slice %82 {offsets = [0, 128], sizes = [8, 128], strides = [1, 1]} : vector<8x384xf32> to vector<8x128xf32>
      %93 = arith.addf %91, %92 : vector<8x128xf32>
      %94 = arith.negf %93 : vector<8x128xf32>
      %95 = math.exp %94 : vector<8x128xf32>
      %cst_38 = arith.constant 1.000000e+00 : f32
      %96 = vector.broadcast %cst_38 : f32 to vector<8x128xf32>
      %97 = arith.addf %96, %95 : vector<8x128xf32>
      %98 = arith.divf %96, %97 : vector<8x128xf32>
      %99 = vector.extract_strided_slice %78 {offsets = [0, 256], sizes = [8, 128], strides = [1, 1]} : vector<8x384xf32> to vector<8x128xf32>
      %100 = vector.extract_strided_slice %82 {offsets = [0, 256], sizes = [8, 128], strides = [1, 1]} : vector<8x384xf32> to vector<8x128xf32>
      %101 = arith.mulf %90, %100 : vector<8x128xf32>
      %102 = arith.addf %99, %101 : vector<8x128xf32>
      %103 = math.tanh %102 : vector<8x128xf32>
      %cst_39 = arith.constant 1.000000e+00 : f32
      %104 = vector.broadcast %cst_39 : f32 to vector<8x128xf32>
      %105 = arith.subf %104, %98 : vector<8x128xf32>
      %106 = arith.mulf %105, %103 : vector<8x128xf32>
      %107 = arith.mulf %98, %68 : vector<8x128xf32>
      %108 = arith.addf %106, %107 : vector<8x128xf32>
      %109 = vector.broadcast %c1_i32 : i32 to vector<8x128xi32>
      %110 = arith.cmpi slt, %109, %29 : vector<8x128xi32>
      %111 = arith.select %110, %108, %68 : vector<8x128xi1>, vector<8x128xf32>
      %cst_40 = arith.constant 0.000000e+00 : f32
      %112 = vector.broadcast %cst_40 : f32 to vector<8x128xf32>
      %113 = arith.select %110, %111, %112 : vector<8x128xi1>, vector<8x128xf32>
      %114 = arith.truncf %113 : vector<8x128xf32> to vector<8x128xbf16>
      %115 = arith.index_cast %75 : i32 to index
      %c0_41 = arith.constant 0 : index
      %116 = vector.load %arg13[%115, %c0_41] : memref<64x128xbf16, #tpu.memory_space<vmem>>, vector<8x128xbf16>
      tpu.vector_store %arg13[%115, %c0_41], %114 {strides = array<i32>} : memref<64x128xbf16, #tpu.memory_space<vmem>>, vector<8x128xbf16>,
      %c2_i32 = arith.constant 2 : i32
      %c8_i32_42 = arith.constant 8 : i32
      %117 = arith.muli %c2_i32, %c8_i32_42 : i32
      %118 = tpu.assume_multiple %117, 8 : i32
      %119 = arith.index_cast %118 : i32 to index
      %c0_43 = arith.constant 0 : index
      %120 = vector.load %arg12[%119, %c0_43] : memref<64x384xbf16, #tpu.memory_space<vmem>>, vector<8x384xbf16>
      %121 = arith.extf %120 : vector<8x384xbf16> to vector<8x384xf32>
      %122 = arith.truncf %111 : vector<8x128xf32> to vector<8x128xbf16>
      %cst_44 = arith.constant dense<0.000000e+00> : vector<8x384xf32>
      %123 = tpu.matmul %122, %25, %cst_44 {dimension_numbers = #tpu.dot_dimension_numbers<[1], [0], [0], [1], [0, 0, 1, 1], [], []>} : vector<8x128xbf16>, vector<128x384xbf16>, vector<8x384xf32> -> vector<8x384xf32>
      %124 = vector.broadcast %26 : vector<1x384xf32> to vector<8x384xf32>
      %125 = arith.addf %123, %124 : vector<8x384xf32>
      %126 = vector.extract_strided_slice %121 {offsets = [0, 0], sizes = [8, 128], strides = [1, 1]} : vector<8x384xf32> to vector<8x128xf32>
      %127 = vector.extract_strided_slice %125 {offsets = [0, 0], sizes = [8, 128], strides = [1, 1]} : vector<8x384xf32> to vector<8x128xf32>
      %128 = arith.addf %126, %127 : vector<8x128xf32>
      %129 = arith.negf %128 : vector<8x128xf32>
      %130 = math.exp %129 : vector<8x128xf32>
      %cst_45 = arith.constant 1.000000e+00 : f32
      %131 = vector.broadcast %cst_45 : f32 to vector<8x128xf32>
      %132 = arith.addf %131, %130 : vector<8x128xf32>
      %133 = arith.divf %131, %132 : vector<8x128xf32>
      %134 = vector.extract_strided_slice %121 {offsets = [0, 128], sizes = [8, 128], strides = [1, 1]} : vector<8x384xf32> to vector<8x128xf32>
      %135 = vector.extract_strided_slice %125 {offsets = [0, 128], sizes = [8, 128], strides = [1, 1]} : vector<8x384xf32> to vector<8x128xf32>
      %136 = arith.addf %134, %135 : vector<8x128xf32>
      %137 = arith.negf %136 : vector<8x128xf32>
      %138 = math.exp %137 : vector<8x128xf32>
      %cst_46 = arith.constant 1.000000e+00 : f32
      %139 = vector.broadcast %cst_46 : f32 to vector<8x128xf32>
      %140 = arith.addf %139, %138 : vector<8x128xf32>
      %141 = arith.divf %139, %140 : vector<8x128xf32>
      %142 = vector.extract_strided_slice %121 {offsets = [0, 256], sizes = [8, 128], strides = [1, 1]} : vector<8x384xf32> to vector<8x128xf32>
      %143 = vector.extract_strided_slice %125 {offsets = [0, 256], sizes = [8, 128], strides = [1, 1]} : vector<8x384xf32> to vector<8x128xf32>
      %144 = arith.mulf %133, %143 : vector<8x128xf32>
      %145 = arith.addf %142, %144 : vector<8x128xf32>
      %146 = math.tanh %145 : vector<8x128xf32>
      %cst_47 = arith.constant 1.000000e+00 : f32
      %147 = vector.broadcast %cst_47 : f32 to vector<8x128xf32>
      %148 = arith.subf %147, %141 : vector<8x128xf32>
      %149 = arith.mulf %148, %146 : vector<8x128xf32>
      %150 = arith.mulf %141, %111 : vector<8x128xf32>
      %151 = arith.addf %149, %150 : vector<8x128xf32>
      %152 = vector.broadcast %c2_i32 : i32 to vector<8x128xi32>
      %153 = arith.cmpi slt, %152, %29 : vector<8x128xi32>
      %154 = arith.select %153, %151, %111 : vector<8x128xi1>, vector<8x128xf32>
      %cst_48 = arith.constant 0.000000e+00 : f32
      %155 = vector.broadcast %cst_48 : f32 to vector<8x128xf32>
      %156 = arith.select %153, %154, %155 : vector<8x128xi1>, vector<8x128xf32>
      %157 = arith.truncf %156 : vector<8x128xf32> to vector<8x128xbf16>
      %158 = arith.index_cast %118 : i32 to index
      %c0_49 = arith.constant 0 : index
      %159 = vector.load %arg13[%158, %c0_49] : memref<64x128xbf16, #tpu.memory_space<vmem>>, vector<8x128xbf16>
      tpu.vector_store %arg13[%158, %c0_49], %157 {strides = array<i32>} : memref<64x128xbf16, #tpu.memory_space<vmem>>, vector<8x128xbf16>,
      %c3_i32 = arith.constant 3 : i32
      %c8_i32_50 = arith.constant 8 : i32
      %160 = arith.muli %c3_i32, %c8_i32_50 : i32
      %161 = tpu.assume_multiple %160, 8 : i32
      %162 = arith.index_cast %161 : i32 to index
      %c0_51 = arith.constant 0 : index
      %163 = vector.load %arg12[%162, %c0_51] : memref<64x384xbf16, #tpu.memory_space<vmem>>, vector<8x384xbf16>
      %164 = arith.extf %163 : vector<8x384xbf16> to vector<8x384xf32>
      %165 = arith.truncf %154 : vector<8x128xf32> to vector<8x128xbf16>
      %cst_52 = arith.constant dense<0.000000e+00> : vector<8x384xf32>
      %166 = tpu.matmul %165, %25, %cst_52 {dimension_numbers = #tpu.dot_dimension_numbers<[1], [0], [0], [1], [0, 0, 1, 1], [], []>} : vector<8x128xbf16>, vector<128x384xbf16>, vector<8x384xf32> -> vector<8x384xf32>
      %167 = vector.broadcast %26 : vector<1x384xf32> to vector<8x384xf32>
      %168 = arith.addf %166, %167 : vector<8x384xf32>
      %169 = vector.extract_strided_slice %164 {offsets = [0, 0], sizes = [8, 128], strides = [1, 1]} : vector<8x384xf32> to vector<8x128xf32>
      %170 = vector.extract_strided_slice %168 {offsets = [0, 0], sizes = [8, 128], strides = [1, 1]} : vector<8x384xf32> to vector<8x128xf32>
      %171 = arith.addf %169, %170 : vector<8x128xf32>
      %172 = arith.negf %171 : vector<8x128xf32>
      %173 = math.exp %172 : vector<8x128xf32>
      %cst_53 = arith.constant 1.000000e+00 : f32
      %174 = vector.broadcast %cst_53 : f32 to vector<8x128xf32>
      %175 = arith.addf %174, %173 : vector<8x128xf32>
      %176 = arith.divf %174, %175 : vector<8x128xf32>
      %177 = vector.extract_strided_slice %164 {offsets = [0, 128], sizes = [8, 128], strides = [1, 1]} : vector<8x384xf32> to vector<8x128xf32>
      %178 = vector.extract_strided_slice %168 {offsets = [0, 128], sizes = [8, 128], strides = [1, 1]} : vector<8x384xf32> to vector<8x128xf32>
      %179 = arith.addf %177, %178 : vector<8x128xf32>
      %180 = arith.negf %179 : vector<8x128xf32>
      %181 = math.exp %180 : vector<8x128xf32>
      %cst_54 = arith.constant 1.000000e+00 : f32
      %182 = vector.broadcast %cst_54 : f32 to vector<8x128xf32>
      %183 = arith.addf %182, %181 : vector<8x128xf32>
      %184 = arith.divf %182, %183 : vector<8x128xf32>
      %185 = vector.extract_strided_slice %164 {offsets = [0, 256], sizes = [8, 128], strides = [1, 1]} : vector<8x384xf32> to vector<8x128xf32>
      %186 = vector.extract_strided_slice %168 {offsets = [0, 256], sizes = [8, 128], strides = [1, 1]} : vector<8x384xf32> to vector<8x128xf32>
      %187 = arith.mulf %176, %186 : vector<8x128xf32>
      %188 = arith.addf %185, %187 : vector<8x128xf32>
      %189 = math.tanh %188 : vector<8x128xf32>
      %cst_55 = arith.constant 1.000000e+00 : f32
      %190 = vector.broadcast %cst_55 : f32 to vector<8x128xf32>
      %191 = arith.subf %190, %184 : vector<8x128xf32>
      %192 = arith.mulf %191, %189 : vector<8x128xf32>
      %193 = arith.mulf %184, %154 : vector<8x128xf32>
      %194 = arith.addf %192, %193 : vector<8x128xf32>
      %195 = vector.broadcast %c3_i32 : i32 to vector<8x128xi32>
      %196 = arith.cmpi slt, %195, %29 : vector<8x128xi32>
      %197 = arith.select %196, %194, %154 : vector<8x128xi1>, vector<8x128xf32>
      %cst_56 = arith.constant 0.000000e+00 : f32
      %198 = vector.broadcast %cst_56 : f32 to vector<8x128xf32>
      %199 = arith.select %196, %197, %198 : vector<8x128xi1>, vector<8x128xf32>
      %200 = arith.truncf %199 : vector<8x128xf32> to vector<8x128xbf16>
      %201 = arith.index_cast %161 : i32 to index
      %c0_57 = arith.constant 0 : index
      %202 = vector.load %arg13[%201, %c0_57] : memref<64x128xbf16, #tpu.memory_space<vmem>>, vector<8x128xbf16>
      tpu.vector_store %arg13[%201, %c0_57], %200 {strides = array<i32>} : memref<64x128xbf16, #tpu.memory_space<vmem>>, vector<8x128xbf16>,
      %c4_i32 = arith.constant 4 : i32
      %c8_i32_58 = arith.constant 8 : i32
      %203 = arith.muli %c4_i32, %c8_i32_58 : i32
      %204 = tpu.assume_multiple %203, 8 : i32
      %205 = arith.index_cast %204 : i32 to index
      %c0_59 = arith.constant 0 : index
      %206 = vector.load %arg12[%205, %c0_59] : memref<64x384xbf16, #tpu.memory_space<vmem>>, vector<8x384xbf16>
      %207 = arith.extf %206 : vector<8x384xbf16> to vector<8x384xf32>
      %208 = arith.truncf %197 : vector<8x128xf32> to vector<8x128xbf16>
      %cst_60 = arith.constant dense<0.000000e+00> : vector<8x384xf32>
      %209 = tpu.matmul %208, %25, %cst_60 {dimension_numbers = #tpu.dot_dimension_numbers<[1], [0], [0], [1], [0, 0, 1, 1], [], []>} : vector<8x128xbf16>, vector<128x384xbf16>, vector<8x384xf32> -> vector<8x384xf32>
      %210 = vector.broadcast %26 : vector<1x384xf32> to vector<8x384xf32>
      %211 = arith.addf %209, %210 : vector<8x384xf32>
      %212 = vector.extract_strided_slice %207 {offsets = [0, 0], sizes = [8, 128], strides = [1, 1]} : vector<8x384xf32> to vector<8x128xf32>
      %213 = vector.extract_strided_slice %211 {offsets = [0, 0], sizes = [8, 128], strides = [1, 1]} : vector<8x384xf32> to vector<8x128xf32>
      %214 = arith.addf %212, %213 : vector<8x128xf32>
      %215 = arith.negf %214 : vector<8x128xf32>
      %216 = math.exp %215 : vector<8x128xf32>
      %cst_61 = arith.constant 1.000000e+00 : f32
      %217 = vector.broadcast %cst_61 : f32 to vector<8x128xf32>
      %218 = arith.addf %217, %216 : vector<8x128xf32>
      %219 = arith.divf %217, %218 : vector<8x128xf32>
      %220 = vector.extract_strided_slice %207 {offsets = [0, 128], sizes = [8, 128], strides = [1, 1]} : vector<8x384xf32> to vector<8x128xf32>
      %221 = vector.extract_strided_slice %211 {offsets = [0, 128], sizes = [8, 128], strides = [1, 1]} : vector<8x384xf32> to vector<8x128xf32>
      %222 = arith.addf %220, %221 : vector<8x128xf32>
      %223 = arith.negf %222 : vector<8x128xf32>
      %224 = math.exp %223 : vector<8x128xf32>
      %cst_62 = arith.constant 1.000000e+00 : f32
      %225 = vector.broadcast %cst_62 : f32 to vector<8x128xf32>
      %226 = arith.addf %225, %224 : vector<8x128xf32>
      %227 = arith.divf %225, %226 : vector<8x128xf32>
      %228 = vector.extract_strided_slice %207 {offsets = [0, 256], sizes = [8, 128], strides = [1, 1]} : vector<8x384xf32> to vector<8x128xf32>
      %229 = vector.extract_strided_slice %211 {offsets = [0, 256], sizes = [8, 128], strides = [1, 1]} : vector<8x384xf32> to vector<8x128xf32>
      %230 = arith.mulf %219, %229 : vector<8x128xf32>
      %231 = arith.addf %228, %230 : vector<8x128xf32>
      %232 = math.tanh %231 : vector<8x128xf32>
      %cst_63 = arith.constant 1.000000e+00 : f32
      %233 = vector.broadcast %cst_63 : f32 to vector<8x128xf32>
      %234 = arith.subf %233, %227 : vector<8x128xf32>
      %235 = arith.mulf %234, %232 : vector<8x128xf32>
      %236 = arith.mulf %227, %197 : vector<8x128xf32>
      %237 = arith.addf %235, %236 : vector<8x128xf32>
      %238 = vector.broadcast %c4_i32 : i32 to vector<8x128xi32>
      %239 = arith.cmpi slt, %238, %29 : vector<8x128xi32>
      %240 = arith.select %239, %237, %197 : vector<8x128xi1>, vector<8x128xf32>
      %cst_64 = arith.constant 0.000000e+00 : f32
      %241 = vector.broadcast %cst_64 : f32 to vector<8x128xf32>
      %242 = arith.select %239, %240, %241 : vector<8x128xi1>, vector<8x128xf32>
      %243 = arith.truncf %242 : vector<8x128xf32> to vector<8x128xbf16>
      %244 = arith.index_cast %204 : i32 to index
      %c0_65 = arith.constant 0 : index
      %245 = vector.load %arg13[%244, %c0_65] : memref<64x128xbf16, #tpu.memory_space<vmem>>, vector<8x128xbf16>
      tpu.vector_store %arg13[%244, %c0_65], %243 {strides = array<i32>} : memref<64x128xbf16, #tpu.memory_space<vmem>>, vector<8x128xbf16>,
      %c5_i32 = arith.constant 5 : i32
      %c8_i32_66 = arith.constant 8 : i32
      %246 = arith.muli %c5_i32, %c8_i32_66 : i32
      %247 = tpu.assume_multiple %246, 8 : i32
      %248 = arith.index_cast %247 : i32 to index
      %c0_67 = arith.constant 0 : index
      %249 = vector.load %arg12[%248, %c0_67] : memref<64x384xbf16, #tpu.memory_space<vmem>>, vector<8x384xbf16>
      %250 = arith.extf %249 : vector<8x384xbf16> to vector<8x384xf32>
      %251 = arith.truncf %240 : vector<8x128xf32> to vector<8x128xbf16>
      %cst_68 = arith.constant dense<0.000000e+00> : vector<8x384xf32>
      %252 = tpu.matmul %251, %25, %cst_68 {dimension_numbers = #tpu.dot_dimension_numbers<[1], [0], [0], [1], [0, 0, 1, 1], [], []>} : vector<8x128xbf16>, vector<128x384xbf16>, vector<8x384xf32> -> vector<8x384xf32>
      %253 = vector.broadcast %26 : vector<1x384xf32> to vector<8x384xf32>
      %254 = arith.addf %252, %253 : vector<8x384xf32>
      %255 = vector.extract_strided_slice %250 {offsets = [0, 0], sizes = [8, 128], strides = [1, 1]} : vector<8x384xf32> to vector<8x128xf32>
      %256 = vector.extract_strided_slice %254 {offsets = [0, 0], sizes = [8, 128], strides = [1, 1]} : vector<8x384xf32> to vector<8x128xf32>
      %257 = arith.addf %255, %256 : vector<8x128xf32>
      %258 = arith.negf %257 : vector<8x128xf32>
      %259 = math.exp %258 : vector<8x128xf32>
      %cst_69 = arith.constant 1.000000e+00 : f32
      %260 = vector.broadcast %cst_69 : f32 to vector<8x128xf32>
      %261 = arith.addf %260, %259 : vector<8x128xf32>
      %262 = arith.divf %260, %261 : vector<8x128xf32>
      %263 = vector.extract_strided_slice %250 {offsets = [0, 128], sizes = [8, 128], strides = [1, 1]} : vector<8x384xf32> to vector<8x128xf32>
      %264 = vector.extract_strided_slice %254 {offsets = [0, 128], sizes = [8, 128], strides = [1, 1]} : vector<8x384xf32> to vector<8x128xf32>
      %265 = arith.addf %263, %264 : vector<8x128xf32>
      %266 = arith.negf %265 : vector<8x128xf32>
      %267 = math.exp %266 : vector<8x128xf32>
      %cst_70 = arith.constant 1.000000e+00 : f32
      %268 = vector.broadcast %cst_70 : f32 to vector<8x128xf32>
      %269 = arith.addf %268, %267 : vector<8x128xf32>
      %270 = arith.divf %268, %269 : vector<8x128xf32>
      %271 = vector.extract_strided_slice %250 {offsets = [0, 256], sizes = [8, 128], strides = [1, 1]} : vector<8x384xf32> to vector<8x128xf32>
      %272 = vector.extract_strided_slice %254 {offsets = [0, 256], sizes = [8, 128], strides = [1, 1]} : vector<8x384xf32> to vector<8x128xf32>
      %273 = arith.mulf %262, %272 : vector<8x128xf32>
      %274 = arith.addf %271, %273 : vector<8x128xf32>
      %275 = math.tanh %274 : vector<8x128xf32>
      %cst_71 = arith.constant 1.000000e+00 : f32
      %276 = vector.broadcast %cst_71 : f32 to vector<8x128xf32>
      %277 = arith.subf %276, %270 : vector<8x128xf32>
      %278 = arith.mulf %277, %275 : vector<8x128xf32>
      %279 = arith.mulf %270, %240 : vector<8x128xf32>
      %280 = arith.addf %278, %279 : vector<8x128xf32>
      %281 = vector.broadcast %c5_i32 : i32 to vector<8x128xi32>
      %282 = arith.cmpi slt, %281, %29 : vector<8x128xi32>
      %283 = arith.select %282, %280, %240 : vector<8x128xi1>, vector<8x128xf32>
      %cst_72 = arith.constant 0.000000e+00 : f32
      %284 = vector.broadcast %cst_72 : f32 to vector<8x128xf32>
      %285 = arith.select %282, %283, %284 : vector<8x128xi1>, vector<8x128xf32>
      %286 = arith.truncf %285 : vector<8x128xf32> to vector<8x128xbf16>
      %287 = arith.index_cast %247 : i32 to index
      %c0_73 = arith.constant 0 : index
      %288 = vector.load %arg13[%287, %c0_73] : memref<64x128xbf16, #tpu.memory_space<vmem>>, vector<8x128xbf16>
      tpu.vector_store %arg13[%287, %c0_73], %286 {strides = array<i32>} : memref<64x128xbf16, #tpu.memory_space<vmem>>, vector<8x128xbf16>,
      %c6_i32 = arith.constant 6 : i32
      %c8_i32_74 = arith.constant 8 : i32
      %289 = arith.muli %c6_i32, %c8_i32_74 : i32
      %290 = tpu.assume_multiple %289, 8 : i32
      %291 = arith.index_cast %290 : i32 to index
      %c0_75 = arith.constant 0 : index
      %292 = vector.load %arg12[%291, %c0_75] : memref<64x384xbf16, #tpu.memory_space<vmem>>, vector<8x384xbf16>
      %293 = arith.extf %292 : vector<8x384xbf16> to vector<8x384xf32>
      %294 = arith.truncf %283 : vector<8x128xf32> to vector<8x128xbf16>
      %cst_76 = arith.constant dense<0.000000e+00> : vector<8x384xf32>
      %295 = tpu.matmul %294, %25, %cst_76 {dimension_numbers = #tpu.dot_dimension_numbers<[1], [0], [0], [1], [0, 0, 1, 1], [], []>} : vector<8x128xbf16>, vector<128x384xbf16>, vector<8x384xf32> -> vector<8x384xf32>
      %296 = vector.broadcast %26 : vector<1x384xf32> to vector<8x384xf32>
      %297 = arith.addf %295, %296 : vector<8x384xf32>
      %298 = vector.extract_strided_slice %293 {offsets = [0, 0], sizes = [8, 128], strides = [1, 1]} : vector<8x384xf32> to vector<8x128xf32>
      %299 = vector.extract_strided_slice %297 {offsets = [0, 0], sizes = [8, 128], strides = [1, 1]} : vector<8x384xf32> to vector<8x128xf32>
      %300 = arith.addf %298, %299 : vector<8x128xf32>
      %301 = arith.negf %300 : vector<8x128xf32>
      %302 = math.exp %301 : vector<8x128xf32>
      %cst_77 = arith.constant 1.000000e+00 : f32
      %303 = vector.broadcast %cst_77 : f32 to vector<8x128xf32>
      %304 = arith.addf %303, %302 : vector<8x128xf32>
      %305 = arith.divf %303, %304 : vector<8x128xf32>
      %306 = vector.extract_strided_slice %293 {offsets = [0, 128], sizes = [8, 128], strides = [1, 1]} : vector<8x384xf32> to vector<8x128xf32>
      %307 = vector.extract_strided_slice %297 {offsets = [0, 128], sizes = [8, 128], strides = [1, 1]} : vector<8x384xf32> to vector<8x128xf32>
      %308 = arith.addf %306, %307 : vector<8x128xf32>
      %309 = arith.negf %308 : vector<8x128xf32>
      %310 = math.exp %309 : vector<8x128xf32>
      %cst_78 = arith.constant 1.000000e+00 : f32
      %311 = vector.broadcast %cst_78 : f32 to vector<8x128xf32>
      %312 = arith.addf %311, %310 : vector<8x128xf32>
      %313 = arith.divf %311, %312 : vector<8x128xf32>
      %314 = vector.extract_strided_slice %293 {offsets = [0, 256], sizes = [8, 128], strides = [1, 1]} : vector<8x384xf32> to vector<8x128xf32>
      %315 = vector.extract_strided_slice %297 {offsets = [0, 256], sizes = [8, 128], strides = [1, 1]} : vector<8x384xf32> to vector<8x128xf32>
      %316 = arith.mulf %305, %315 : vector<8x128xf32>
      %317 = arith.addf %314, %316 : vector<8x128xf32>
      %318 = math.tanh %317 : vector<8x128xf32>
      %cst_79 = arith.constant 1.000000e+00 : f32
      %319 = vector.broadcast %cst_79 : f32 to vector<8x128xf32>
      %320 = arith.subf %319, %313 : vector<8x128xf32>
      %321 = arith.mulf %320, %318 : vector<8x128xf32>
      %322 = arith.mulf %313, %283 : vector<8x128xf32>
      %323 = arith.addf %321, %322 : vector<8x128xf32>
      %324 = vector.broadcast %c6_i32 : i32 to vector<8x128xi32>
      %325 = arith.cmpi slt, %324, %29 : vector<8x128xi32>
      %326 = arith.select %325, %323, %283 : vector<8x128xi1>, vector<8x128xf32>
      %cst_80 = arith.constant 0.000000e+00 : f32
      %327 = vector.broadcast %cst_80 : f32 to vector<8x128xf32>
      %328 = arith.select %325, %326, %327 : vector<8x128xi1>, vector<8x128xf32>
      %329 = arith.truncf %328 : vector<8x128xf32> to vector<8x128xbf16>
      %330 = arith.index_cast %290 : i32 to index
      %c0_81 = arith.constant 0 : index
      %331 = vector.load %arg13[%330, %c0_81] : memref<64x128xbf16, #tpu.memory_space<vmem>>, vector<8x128xbf16>
      tpu.vector_store %arg13[%330, %c0_81], %329 {strides = array<i32>} : memref<64x128xbf16, #tpu.memory_space<vmem>>, vector<8x128xbf16>,
      %c7_i32 = arith.constant 7 : i32
      %c8_i32_82 = arith.constant 8 : i32
      %332 = arith.muli %c7_i32, %c8_i32_82 : i32
      %333 = tpu.assume_multiple %332, 8 : i32
      %334 = arith.index_cast %333 : i32 to index
      %c0_83 = arith.constant 0 : index
      %335 = vector.load %arg12[%334, %c0_83] : memref<64x384xbf16, #tpu.memory_space<vmem>>, vector<8x384xbf16>
      %336 = arith.extf %335 : vector<8x384xbf16> to vector<8x384xf32>
      %337 = arith.truncf %326 : vector<8x128xf32> to vector<8x128xbf16>
      %cst_84 = arith.constant dense<0.000000e+00> : vector<8x384xf32>
      %338 = tpu.matmul %337, %25, %cst_84 {dimension_numbers = #tpu.dot_dimension_numbers<[1], [0], [0], [1], [0, 0, 1, 1], [], []>} : vector<8x128xbf16>, vector<128x384xbf16>, vector<8x384xf32> -> vector<8x384xf32>
      %339 = vector.broadcast %26 : vector<1x384xf32> to vector<8x384xf32>
      %340 = arith.addf %338, %339 : vector<8x384xf32>
      %341 = vector.extract_strided_slice %336 {offsets = [0, 0], sizes = [8, 128], strides = [1, 1]} : vector<8x384xf32> to vector<8x128xf32>
      %342 = vector.extract_strided_slice %340 {offsets = [0, 0], sizes = [8, 128], strides = [1, 1]} : vector<8x384xf32> to vector<8x128xf32>
      %343 = arith.addf %341, %342 : vector<8x128xf32>
      %344 = arith.negf %343 : vector<8x128xf32>
      %345 = math.exp %344 : vector<8x128xf32>
      %cst_85 = arith.constant 1.000000e+00 : f32
      %346 = vector.broadcast %cst_85 : f32 to vector<8x128xf32>
      %347 = arith.addf %346, %345 : vector<8x128xf32>
      %348 = arith.divf %346, %347 : vector<8x128xf32>
      %349 = vector.extract_strided_slice %336 {offsets = [0, 128], sizes = [8, 128], strides = [1, 1]} : vector<8x384xf32> to vector<8x128xf32>
      %350 = vector.extract_strided_slice %340 {offsets = [0, 128], sizes = [8, 128], strides = [1, 1]} : vector<8x384xf32> to vector<8x128xf32>
      %351 = arith.addf %349, %350 : vector<8x128xf32>
      %352 = arith.negf %351 : vector<8x128xf32>
      %353 = math.exp %352 : vector<8x128xf32>
      %cst_86 = arith.constant 1.000000e+00 : f32
      %354 = vector.broadcast %cst_86 : f32 to vector<8x128xf32>
      %355 = arith.addf %354, %353 : vector<8x128xf32>
      %356 = arith.divf %354, %355 : vector<8x128xf32>
      %357 = vector.extract_strided_slice %336 {offsets = [0, 256], sizes = [8, 128], strides = [1, 1]} : vector<8x384xf32> to vector<8x128xf32>
      %358 = vector.extract_strided_slice %340 {offsets = [0, 256], sizes = [8, 128], strides = [1, 1]} : vector<8x384xf32> to vector<8x128xf32>
      %359 = arith.mulf %348, %358 : vector<8x128xf32>
      %360 = arith.addf %357, %359 : vector<8x128xf32>
      %361 = math.tanh %360 : vector<8x128xf32>
      %cst_87 = arith.constant 1.000000e+00 : f32
      %362 = vector.broadcast %cst_87 : f32 to vector<8x128xf32>
      %363 = arith.subf %362, %356 : vector<8x128xf32>
      %364 = arith.mulf %363, %361 : vector<8x128xf32>
      %365 = arith.mulf %356, %326 : vector<8x128xf32>
      %366 = arith.addf %364, %365 : vector<8x128xf32>
      %367 = vector.broadcast %c7_i32 : i32 to vector<8x128xi32>
      %368 = arith.cmpi slt, %367, %29 : vector<8x128xi32>
      %369 = arith.select %368, %366, %326 : vector<8x128xi1>, vector<8x128xf32>
      %cst_88 = arith.constant 0.000000e+00 : f32
      %370 = vector.broadcast %cst_88 : f32 to vector<8x128xf32>
      %371 = arith.select %368, %369, %370 : vector<8x128xi1>, vector<8x128xf32>
      %372 = arith.truncf %371 : vector<8x128xf32> to vector<8x128xbf16>
      %373 = arith.index_cast %333 : i32 to index
      %c0_89 = arith.constant 0 : index
      %374 = vector.load %arg13[%373, %c0_89] : memref<64x128xbf16, #tpu.memory_space<vmem>>, vector<8x128xbf16>
      tpu.vector_store %arg13[%373, %c0_89], %372 {strides = array<i32>} : memref<64x128xbf16, #tpu.memory_space<vmem>>, vector<8x128xbf16>,
      %c8_i32_90 = arith.constant 8 : i32
      %c0_91 = arith.constant 0 : index
      %c0_92 = arith.constant 0 : index
      %375 = vector.load %arg11[%c0_91, %c0_92] : memref<8x128xf32, #tpu.memory_space<vmem>>, vector<8x128xf32>
      tpu.vector_store %arg11[%c0_91, %c0_92], %369 {strides = array<i32>} : memref<8x128xf32, #tpu.memory_space<vmem>>, vector<8x128xf32>,
    } else {
    }
    %c32_i32 = arith.constant 32 : i32
    %3 = arith.muli %arg0, %c32_i32 : i32
    %4 = tpu.assume_multiple %3, 32 : i32
    %5 = arith.index_cast %4 : i32 to index
    %c0 = arith.constant 0 : index
    %6 = vector.load %arg13[%5, %c0] : memref<64x128xbf16, #tpu.memory_space<vmem>>, vector<32x128xbf16>
    %c0_1 = arith.constant 0 : index
    %c0_2 = arith.constant 0 : index
    %7 = vector.load %arg7[%c0_1, %c0_2] : memref<128x128xbf16, #tpu.memory_space<vmem>>, vector<128x128xbf16>
    %cst = arith.constant dense<0.000000e+00> : vector<32x128xf32>
    %8 = tpu.matmul %6, %7, %cst {dimension_numbers = #tpu.dot_dimension_numbers<[1], [0], [0], [1], [0, 0, 1, 1], [], []>} : vector<32x128xbf16>, vector<128x128xbf16>, vector<32x128xf32> -> vector<32x128xf32>
    %c0_3 = arith.constant 0 : index
    %c0_4 = arith.constant 0 : index
    %9 = vector.load %arg8[%c0_3, %c0_4] : memref<1x128xf32, #tpu.memory_space<vmem>>, vector<1x128xf32>
    %10 = vector.broadcast %9 : vector<1x128xf32> to vector<32x128xf32>
    %11 = arith.addf %8, %10 : vector<32x128xf32>
    %12 = math.tanh %11 : vector<32x128xf32>
    %13 = arith.truncf %12 : vector<32x128xf32> to vector<32x128xbf16>
    %c0_5 = arith.constant 0 : index
    %c0_6 = arith.constant 0 : index
    %14 = vector.load %arg9[%c0_5, %c0_6] : memref<128x128xbf16, #tpu.memory_space<vmem>>, vector<128x128xbf16>
    %cst_7 = arith.constant dense<0.000000e+00> : vector<32x128xf32>
    %15 = tpu.matmul %13, %14, %cst_7 {dimension_numbers = #tpu.dot_dimension_numbers<[1], [0], [0], [1], [0, 0, 1, 1], [], []>} : vector<32x128xbf16>, vector<128x128xbf16>, vector<32x128xf32> -> vector<32x128xf32>
    %c0_8 = arith.constant 0 : index
    %c0_9 = arith.constant 0 : index
    %16 = vector.load %arg10[%c0_8, %c0_9] : memref<32x128xf32, #tpu.memory_space<vmem>>, vector<32x128xf32>
    tpu.vector_store %arg10[%c0_8, %c0_9], %15 {strides = array<i32>} : memref<32x128xf32, #tpu.memory_space<vmem>>, vector<32x128xf32>,
    return
  }
  func.func @transform_0(%arg0: i32) -> (i32, i32) {
    %c0_i32 = arith.constant 0 : i32
    %c0_i32_0 = arith.constant 0 : i32
    %c0_i32_1 = arith.constant 0 : i32
    return %c0_i32, %c0_i32_0 : i32, i32
  }
  func.func @transform_1(%arg0: i32) -> (i32, i32) {
    %c0_i32 = arith.constant 0 : i32
    %c0_i32_0 = arith.constant 0 : i32
    %c0_i32_1 = arith.constant 0 : i32
    return %c0_i32, %c0_i32_0 : i32, i32
  }
  func.func @transform_2(%arg0: i32) -> (i32, i32) {
    %c0_i32 = arith.constant 0 : i32
    %c0_i32_0 = arith.constant 0 : i32
    %c0_i32_1 = arith.constant 0 : i32
    return %c0_i32, %c0_i32_0 : i32, i32
  }
  func.func @transform_3(%arg0: i32) -> (i32, i32) {
    %c0_i32 = arith.constant 0 : i32
    %c0_i32_0 = arith.constant 0 : i32
    %c0_i32_1 = arith.constant 0 : i32
    return %c0_i32, %c0_i32_0 : i32, i32
  }
  func.func @transform_4(%arg0: i32) -> (i32, i32) {
    %c0_i32 = arith.constant 0 : i32
    %c0_i32_0 = arith.constant 0 : i32
    %c0_i32_1 = arith.constant 0 : i32
    return %c0_i32, %c0_i32_0 : i32, i32
  }
  func.func @transform_5(%arg0: i32) -> (i32, i32) {
    %c0_i32 = arith.constant 0 : i32
    %c0_i32_0 = arith.constant 0 : i32
    %c0_i32_1 = arith.constant 0 : i32
    return %c0_i32, %c0_i32_0 : i32, i32
  }
  func.func @transform_6(%arg0: i32) -> (i32, i32) {
    %c0_i32 = arith.constant 0 : i32
    %c0_i32_0 = arith.constant 0 : i32
    %c0_i32_1 = arith.constant 0 : i32
    return %c0_i32, %c0_i32_0 : i32, i32
  }
  func.func @transform_7(%arg0: i32) -> (i32, i32) {
    %c0_i32 = arith.constant 0 : i32
    %c0_i32_0 = arith.constant 0 : i32
    %c0_i32_1 = arith.constant 0 : i32
    return %c0_i32, %c0_i32_0 : i32, i32
  }
  func.func @transform_8(%arg0: i32) -> (i32, i32) {
    %c0_i32 = arith.constant 0 : i32
    %c0_i32_0 = arith.constant 0 : i32
    %c0_i32_1 = arith.constant 0 : i32
    return %c0_i32, %c0_i32_0 : i32, i32
  }
  func.func @transform_9(%arg0: i32) -> (i32, i32) {
    %c0_i32 = arith.constant 0 : i32
    %c0_i32_0 = arith.constant 0 : i32
    return %arg0, %c0_i32 : i32, i32
  }
  func.func @transform_10(%arg0: i32) -> (i32, i32) {
    %c0_i32 = arith.constant 0 : i32
    %c0_i32_0 = arith.constant 0 : i32
    %c0_i32_1 = arith.constant 0 : i32
    return %c0_i32, %c0_i32_0 : i32, i32
  }
}

</mosaic_0001>

<llo_original>
// kernel: tpu_custom_call.1
$region0: #{tpu_custom_call.1}
  #allocation0 [shape = 'u32[]', space=smem, size = 0x4, offset = 0x4, fixed_abs, tag = 'smem constant byte address 0x4 - core index']
  #allocation1 [shape = 'u32[144,128]{1,0:T(1,128)}', space=vmem, size = 0x12000, scoped, tag = 'internal scratch']
  #allocation2 [shape = 'bf16[64,384]{1,0:T(8,128)(2,1)}', space=vmem, size = 0xc000, scoped, tag = 'scratch operand']
  #allocation3 [shape = 'bf16[64,128]{1,0:T(8,128)(2,1)}', space=vmem, size = 0x4000, scoped, tag = 'scratch operand']
  %s0 = inlined_call_operand.vmem [shape: bf16[64,14], index: 0, kind: input, shape index: {}]
  %s1 = inlined_call_operand.vmem [shape: s32[8,1], index: 1, kind: input, shape index: {}]
  %s2 = inlined_call_operand.vmem [shape: bf16[14,384], index: 2, kind: input, shape index: {}]
  %s3 = inlined_call_operand.vmem [shape: f32[1,384], index: 3, kind: input, shape index: {}]
  %s4 = inlined_call_operand.hbm [shape: bf16[128,384], index: 4, kind: input, shape index: {}]
  %s5 = inlined_call_operand.vmem [shape: f32[1,384], index: 5, kind: input, shape index: {}]
  %s6 = inlined_call_operand.hbm [shape: bf16[128,128], index: 6, kind: input, shape index: {}]
  %s7 = inlined_call_operand.vmem [shape: f32[1,128], index: 7, kind: input, shape index: {}]
  %s8 = inlined_call_operand.hbm [shape: bf16[128,128], index: 8, kind: input, shape index: {}]
  %s9 = inlined_call_operand.hbm [shape: f32[64,128], index: 9, kind: output, shape index: {0}]
  %s10 = inlined_call_operand.hbm [shape: f32[8,128], index: 10, kind: output, shape index: {1}]
  %11 = xla_tuple %s9, %s10
  %s12 = sld [smem:[#allocation0]]
  $region93: #{tpu_custom_call.1} parent=0
    _
  %s14 = ssub.s32 1, %s12
  %s15 = scalar_select 0, %s14, %s12
  $region1: #{tpu_custom_call.1} parent=0
    #allocation4 [shape = 'u8[98304]{0}', space=vmem, size = 0x18000, scoped, tag = 'input window, operand 4, single buffered']
    #allocation5 [shape = 's32[2]{0}', space=sflag, size = 0x8, scoped, tag = 'scoped memory for tpu_custom_call.1']
    #allocation6 [shape = 's32[2]{0}', space=sflag, size = 0x8, scoped, tag = 'scoped memory for tpu_custom_call.1']
    #allocation7 [shape = 'u8[32768]{0}', space=vmem, size = 0x8000, scoped, tag = 'input window, operand 6, single buffered']
    #allocation8 [shape = 's32[1]{0}', space=sflag, size = 0x4, scoped, tag = 'scoped memory for tpu_custom_call.1']
    #allocation9 [shape = 'u8[32768]{0}', space=vmem, size = 0x8000, scoped, tag = 'input window, operand 8, single buffered']
    #allocation10 [shape = 'u8[32768]{0}', space=vmem, size = 0x8000, scoped, tag = 'output window, operand 0']
    #allocation11 [shape = 'u8[4096]{0}', space=vmem, size = 0x1000, scoped, tag = 'output window, operand 1, single buffered']
    #allocation12 [shape = 's32[1]{0}', space=sflag, size = 0x4, scoped, tag = 'scoped memory for tpu_custom_call.1']
    %16 = vsyncpa [#allocation5], 0
    %17 = vsyncpa [#allocation8], 0
    %18 = vsyncpa [#allocation6], 0
    %s19 = scalar_lea.sflag [#allocation6], 1
    %20 = vsyncpa %s19, 0
    %21 = vsyncpa [#allocation12], 0
    loop: start=0, step=1, limit=4
    $region2: #{tpu_custom_call.1} parent=1 // loop_pre_header
      _
    $region3: #{tpu_custom_call.1} parent=1 // loop_header
      %s23 = sphi 0, %s27
      %p24 = scmp.ge.s32.totalorder %s23, 4
      %s31 = sphi 0, %s31
      %s33 = sphi 0, %s31
      %s34 = sphi 0, %s33
      %s48 = sphi 0, %s34
      %s52 = sphi 0, %s52
      %s54 = sphi 0, %s52
      %s55 = sphi 0, %s54
      %s69 = sphi 0, %s55
      %s73 = sphi 0, %s73
      %s75 = sphi 0, %s73
      %s76 = sphi 0, %s75
      %s90 = sphi 0, %s76
      %s94 = sphi 0, %s94
      %s96 = sphi 0, %s94
      %s97 = sphi 0, %s96
      %s111 = sphi 0, %s97
      %s115 = sphi 0, %s115
      %s117 = sphi 0, %s115
      %s118 = sphi 0, %s117
      %s132 = sphi 0, %s118
      %s136 = sphi 0, %s136
      %s138 = sphi 0, %s136
      %s139 = sphi 0, %s138
      %s153 = sphi 0, %s139
      %s157 = sphi 0, %s157
      %s159 = sphi 0, %s157
      %s160 = sphi 0, %s159
      %s174 = sphi 0, %s160
      %s178 = sphi 0, %s178
      %s180 = sphi 0, %s178
      %s181 = sphi 0, %s180
      %s195 = sphi 0, %s181
      %s199 = sphi 0, %s199
      %s201 = sphi 0, %s199
      %s202 = sphi 0, %s201
      %s216 = sphi 0, %s202
      %s222 = sphi 0, %s224
      %s225 = sphi 0, %s222
      %s226 = sphi 0, %s225
      %s242 = sphi 0, %s226
      %s246 = sphi 0, %s246
      %s248 = sphi 0, %s246
      %s249 = sphi 0, %s248
      %s263 = sphi 0, %s249
    $region4: #{tpu_custom_call.1} parent=1 // loop_header_branch
      %26 = sbr.rel (%p24) target = $region8
    $region5: #{tpu_custom_call.1} parent=1 // loop_body
      %s28 = ssub.s32 %s23, 1
      %s29 = ssub.s32 %s23, 2
      %s30 = sadd.s32 %s23, 1
      %s32 = sadd.s32 %s31, 1
      %p35 = scmp.eq.s32.totalorder %s23, 1
      %p36 = scmp.ne.s32.totalorder %s31, %s33
      %p37 = scmp.eq.s32.totalorder %s23, 0
      %p38 = por %p36, %p37
      %p39 = scmp.ne.s32.totalorder %s31, %s33
      %p40 = scmp.eq.s32.totalorder %s28, 1
      %p41 = por %p39, %p40
      %p42 = scmp.ne.s32.totalorder %s33, %s34
      %p43 = scmp.eq.s32.totalorder %s28, 0
      %p44 = por %p42, %p43
      %p45 = scmp.ne.s32.totalorder %s33, %s34
      %p46 = scmp.eq.s32.totalorder %s29, 1
      %p47 = por %p45, %p46
      %p49 = scmp.ne.s32.totalorder %s34, %s48
      %p50 = scmp.eq.s32.totalorder %s29, 0
      %p51 = por %p49, %p50
      %s53 = sadd.s32 %s52, 1
      %p56 = scmp.eq.s32.totalorder %s23, 1
      %p57 = scmp.ne.s32.totalorder %s52, %s54
      %p58 = scmp.eq.s32.totalorder %s23, 0
      %p59 = por %p57, %p58
      %p60 = scmp.ne.s32.totalorder %s52, %s54
      %p61 = scmp.eq.s32.totalorder %s28, 1
      %p62 = por %p60, %p61
      %p63 = scmp.ne.s32.totalorder %s54, %s55
      %p64 = scmp.eq.s32.totalorder %s28, 0
      %p65 = por %p63, %p64
      %p66 = scmp.ne.s32.totalorder %s54, %s55
      %p67 = scmp.eq.s32.totalorder %s29, 1
      %p68 = por %p66, %p67
      %p70 = scmp.ne.s32.totalorder %s55, %s69
      %p71 = scmp.eq.s32.totalorder %s29, 0
      %p72 = por %p70, %p71
      %s74 = sadd.s32 %s73, 1
      %p77 = scmp.eq.s32.totalorder %s23, 1
      %p78 = scmp.ne.s32.totalorder %s73, %s75
      %p79 = scmp.eq.s32.totalorder %s23, 0
      %p80 = por %p78, %p79
      %p81 = scmp.ne.s32.totalorder %s73, %s75
      %p82 = scmp.eq.s32.totalorder %s28, 1
      %p83 = por %p81, %p82
      %p84 = scmp.ne.s32.totalorder %s75, %s76
      %p85 = scmp.eq.s32.totalorder %s28, 0
      %p86 = por %p84, %p85
      %p87 = scmp.ne.s32.totalorder %s75, %s76
      %p88 = scmp.eq.s32.totalorder %s29, 1
      %p89 = por %p87, %p88
      %p91 = scmp.ne.s32.totalorder %s76, %s90
      %p92 = scmp.eq.s32.totalorder %s29, 0
      %p93 = por %p91, %p92
      %s95 = sadd.s32 %s94, 1
      %p98 = scmp.eq.s32.totalorder %s23, 1
      %p99 = scmp.ne.s32.totalorder %s94, %s96
      %p100 = scmp.eq.s32.totalorder %s23, 0
      %p101 = por %p99, %p100
      %p102 = scmp.ne.s32.totalorder %s94, %s96
      %p103 = scmp.eq.s32.totalorder %s28, 1
      %p104 = por %p102, %p103
      %p105 = scmp.ne.s32.totalorder %s96, %s97
      %p106 = scmp.eq.s32.totalorder %s28, 0
      %p107 = por %p105, %p106
      %p108 = scmp.ne.s32.totalorder %s96, %s97
      %p109 = scmp.eq.s32.totalorder %s29, 1
      %p110 = por %p108, %p109
      %p112 = scmp.ne.s32.totalorder %s97, %s111
      %p113 = scmp.eq.s32.totalorder %s29, 0
      %p114 = por %p112, %p113
      %s116 = sadd.s32 %s115, 1
      %p119 = scmp.eq.s32.totalorder %s23, 1
      %p120 = scmp.ne.s32.totalorder %s115, %s117
      %p121 = scmp.eq.s32.totalorder %s23, 0
      %p122 = por %p120, %p121
      %p123 = scmp.ne.s32.totalorder %s115, %s117
      %p124 = scmp.eq.s32.totalorder %s28, 1
      %p125 = por %p123, %p124
      %p126 = scmp.ne.s32.totalorder %s117, %s118
      %p127 = scmp.eq.s32.totalorder %s28, 0
      %p128 = por %p126, %p127
      %p129 = scmp.ne.s32.totalorder %s117, %s118
      %p130 = scmp.eq.s32.totalorder %s29, 1
      %p131 = por %p129, %p130
      %p133 = scmp.ne.s32.totalorder %s118, %s132
      %p134 = scmp.eq.s32.totalorder %s29, 0
      %p135 = por %p133, %p134
      %s137 = sadd.s32 %s136, 1
      %p140 = scmp.eq.s32.totalorder %s23, 1
      %p141 = scmp.ne.s32.totalorder %s136, %s138
      %p142 = scmp.eq.s32.totalorder %s23, 0
      %p143 = por %p141, %p142
      %p144 = scmp.ne.s32.totalorder %s136, %s138
      %p145 = scmp.eq.s32.totalorder %s28, 1
      %p146 = por %p144, %p145
      %p147 = scmp.ne.s32.totalorder %s138, %s139
      %p148 = scmp.eq.s32.totalorder %s28, 0
      %p149 = por %p147, %p148
      %p150 = scmp.ne.s32.totalorder %s138, %s139
      %p151 = scmp.eq.s32.totalorder %s29, 1
      %p152 = por %p150, %p151
      %p154 = scmp.ne.s32.totalorder %s139, %s153
      %p155 = scmp.eq.s32.totalorder %s29, 0
      %p156 = por %p154, %p155
      %s158 = sadd.s32 %s157, 1
      %p161 = scmp.eq.s32.totalorder %s23, 1
      %p162 = scmp.ne.s32.totalorder %s157, %s159
      %p163 = scmp.eq.s32.totalorder %s23, 0
      %p164 = por %p162, %p163
      %p165 = scmp.ne.s32.totalorder %s157, %s159
      %p166 = scmp.eq.s32.totalorder %s28, 1
      %p167 = por %p165, %p166
      %p168 = scmp.ne.s32.totalorder %s159, %s160
      %p169 = scmp.eq.s32.totalorder %s28, 0
      %p170 = por %p168, %p169
      %p171 = scmp.ne.s32.totalorder %s159, %s160
      %p172 = scmp.eq.s32.totalorder %s29, 1
      %p173 = por %p171, %p172
      %p175 = scmp.ne.s32.totalorder %s160, %s174
      %p176 = scmp.eq.s32.totalorder %s29, 0
      %p177 = por %p175, %p176
      %s179 = sadd.s32 %s178, 1
      %p182 = scmp.eq.s32.totalorder %s23, 1
      %p183 = scmp.ne.s32.totalorder %s178, %s180
      %p184 = scmp.eq.s32.totalorder %s23, 0
      %p185 = por %p183, %p184
      %p186 = scmp.ne.s32.totalorder %s178, %s180
      %p187 = scmp.eq.s32.totalorder %s28, 1
      %p188 = por %p186, %p187
      %p189 = scmp.ne.s32.totalorder %s180, %s181
      %p190 = scmp.eq.s32.totalorder %s28, 0
      %p191 = por %p189, %p190
      %p192 = scmp.ne.s32.totalorder %s180, %s181
      %p193 = scmp.eq.s32.totalorder %s29, 1
      %p194 = por %p192, %p193
      %p196 = scmp.ne.s32.totalorder %s181, %s195
      %p197 = scmp.eq.s32.totalorder %s29, 0
      %p198 = por %p196, %p197
      %s200 = sadd.s32 %s199, 1
      %p203 = scmp.eq.s32.totalorder %s23, 1
      %p204 = scmp.ne.s32.totalorder %s199, %s201
      %p205 = scmp.eq.s32.totalorder %s23, 0
      %p206 = por %p204, %p205
      %p207 = scmp.ne.s32.totalorder %s199, %s201
      %p208 = scmp.eq.s32.totalorder %s28, 1
      %p209 = por %p207, %p208
      %p210 = scmp.ne.s32.totalorder %s201, %s202
      %p211 = scmp.eq.s32.totalorder %s28, 0
      %p212 = por %p210, %p211
      %p213 = scmp.ne.s32.totalorder %s201, %s202
      %p214 = scmp.eq.s32.totalorder %s29, 1
      %p215 = por %p213, %p214
      %p217 = scmp.ne.s32.totalorder %s202, %s216
      %p218 = scmp.eq.s32.totalorder %s29, 0
      %p219 = por %p217, %p218
      %s220 = ssub.s32 %s23, %s30
      %p221 = scmp.eq.s32.totalorder %s220, 0
      %s223 = sadd.s32 %s222, 1
      %s224 = scalar_select %p221, %s222, %s223
      %p227 = pneg %p221
      %p228 = scmp.eq.s32.totalorder %s23, 1
      %p229 = por %p227, %p228
      %p230 = scmp.ne.s32.totalorder %s222, %s225
      %p231 = scmp.eq.s32.totalorder %s23, 0
      %p232 = por %p230, %p231
      %p233 = scmp.ne.s32.totalorder %s222, %s225
      %p234 = scmp.eq.s32.totalorder %s28, 1
      %p235 = por %p233, %p234
      %p236 = scmp.ne.s32.totalorder %s225, %s226
      %p237 = scmp.eq.s32.totalorder %s28, 0
      %p238 = por %p236, %p237
      %p239 = scmp.ne.s32.totalorder %s225, %s226
      %p240 = scmp.eq.s32.totalorder %s29, 1
      %p241 = por %p239, %p240
      %p243 = scmp.ne.s32.totalorder %s226, %s242
      %p244 = scmp.eq.s32.totalorder %s29, 0
      %p245 = por %p243, %p244
      %s247 = sadd.s32 %s246, 1
      %p250 = scmp.eq.s32.totalorder %s23, 1
      %p251 = scmp.ne.s32.totalorder %s246, %s248
      %p252 = scmp.eq.s32.totalorder %s23, 0
      %p253 = por %p251, %p252
      %p254 = scmp.ne.s32.totalorder %s246, %s248
      %p255 = scmp.eq.s32.totalorder %s28, 1
      %p256 = por %p254, %p255
      %p257 = scmp.ne.s32.totalorder %s248, %s249
      %p258 = scmp.eq.s32.totalorder %s28, 0
      %p259 = por %p257, %p258
      %p260 = scmp.ne.s32.totalorder %s248, %s249
      %p261 = scmp.eq.s32.totalorder %s29, 1
      %p262 = por %p260, %p261
      %p264 = scmp.ne.s32.totalorder %s249, %s263
      %p265 = scmp.eq.s32.totalorder %s29, 0
      %p266 = por %p264, %p265
      %p267 = scmp.le.s32.totalorder 1, %s23
      %p268 = scmp.lt.s32.totalorder %s23, 3
      %p269 = pnand %p267, %p268
      %p270 = pneg %p269
      // Predicated region
      $region9: #{tpu_custom_call.1} parent=5 // pred_check
        _
      $region10: #{tpu_custom_call.1} parent=5 // pred_check_branch
        %272 = sbr.rel (%p269) target = $region12
      $region11: #{tpu_custom_call.1} parent=5 // pred_region
        %s273 = ssub.s32 %s23, 1
        // Predicated region
        $region13: #{tpu_custom_call.1} parent=11 // pred_check
          %p274 = pneg %p44
        $region14: #{tpu_custom_call.1} parent=11 // pred_check_branch
          %276 = sbr.rel (%p274) target = $region16
        $region15: #{tpu_custom_call.1} parent=11 // pred_region
          _
        $region16: #{tpu_custom_call.1} parent=11 // pred_fallthru
          _
        // Predicated region
        $region17: #{tpu_custom_call.1} parent=11 // pred_check
          %p277 = pneg %p65
        $region18: #{tpu_custom_call.1} parent=11 // pred_check_branch
          %279 = sbr.rel (%p277) target = $region20
        $region19: #{tpu_custom_call.1} parent=11 // pred_region
          _
        $region20: #{tpu_custom_call.1} parent=11 // pred_fallthru
          _
        // Predicated region
        $region21: #{tpu_custom_call.1} parent=11 // pred_check
          %p280 = pneg %p86
        $region22: #{tpu_custom_call.1} parent=11 // pred_check_branch
          %282 = sbr.rel (%p280) target = $region24
        $region23: #{tpu_custom_call.1} parent=11 // pred_region
          _
        $region24: #{tpu_custom_call.1} parent=11 // pred_fallthru
          _
        // Predicated region
        $region25: #{tpu_custom_call.1} parent=11 // pred_check
          %p283 = pneg %p107
        $region26: #{tpu_custom_call.1} parent=11 // pred_check_branch
          %285 = sbr.rel (%p283) target = $region28
        $region27: #{tpu_custom_call.1} parent=11 // pred_region
          _
        $region28: #{tpu_custom_call.1} parent=11 // pred_fallthru
          _
        // Predicated region
        $region29: #{tpu_custom_call.1} parent=11 // pred_check
          %p286 = pneg %p128
        $region30: #{tpu_custom_call.1} parent=11 // pred_check_branch
          %288 = sbr.rel (%p286) target = $region32
        $region31: #{tpu_custom_call.1} parent=11 // pred_region
          %s290 = ssub.s32 3072, 3072
          %291 = vsyncadd [#allocation5], %s290
          %s292 = sshll.u32 [#allocation4], 4
          %s293 = int_to_ptr.vmem [resolvable:$true] %s292
          %298 = dma.hbm_to_vmem [thread:$0]  %s4, 3072, %s293, [#allocation5], 192, 192, 12
        $region32: #{tpu_custom_call.1} parent=11 // pred_fallthru
          _
        // Predicated region
        $region33: #{tpu_custom_call.1} parent=11 // pred_check
          %p299 = pneg %p149
        $region34: #{tpu_custom_call.1} parent=11 // pred_check_branch
          %301 = sbr.rel (%p299) target = $region36
        $region35: #{tpu_custom_call.1} parent=11 // pred_region
          _
        $region36: #{tpu_custom_call.1} parent=11 // pred_fallthru
          _
        // Predicated region
        $region37: #{tpu_custom_call.1} parent=11 // pred_check
          %p302 = pneg %p170
        $region38: #{tpu_custom_call.1} parent=11 // pred_check_branch
          %304 = sbr.rel (%p302) target = $region40
        $region39: #{tpu_custom_call.1} parent=11 // pred_region
          %s306 = ssub.s32 1024, 1024
          %307 = vsyncadd [#allocation8], %s306
          %s308 = sshll.u32 [#allocation7], 4
          %s309 = int_to_ptr.vmem [resolvable:$true] %s308
          %314 = dma.hbm_to_vmem [thread:$0]  %s6, 1024, %s309, [#allocation8], 64, 64, 4
        $region40: #{tpu_custom_call.1} parent=11 // pred_fallthru
          _
        // Predicated region
        $region41: #{tpu_custom_call.1} parent=11 // pred_check
          %p315 = pneg %p191
        $region42: #{tpu_custom_call.1} parent=11 // pred_check_branch
          %317 = sbr.rel (%p315) target = $region44
        $region43: #{tpu_custom_call.1} parent=11 // pred_region
          _
        $region44: #{tpu_custom_call.1} parent=11 // pred_fallthru
          _
        // Predicated region
        $region45: #{tpu_custom_call.1} parent=11 // pred_check
          %p318 = pneg %p212
        $region46: #{tpu_custom_call.1} parent=11 // pred_check_branch
          %320 = sbr.rel (%p318) target = $region48
        $region47: #{tpu_custom_call.1} parent=11 // pred_region
          %s322 = ssub.s32 1024, 1024
          %323 = vsyncadd [#allocation8], %s322
          %s324 = sshll.u32 [#allocation9], 4
          %s325 = int_to_ptr.vmem [resolvable:$true] %s324
          %330 = dma.hbm_to_vmem [thread:$0]  %s8, 1024, %s325, [#allocation8], 64, 64, 4
        $region48: #{tpu_custom_call.1} parent=11 // pred_fallthru
          _
      $region12: #{tpu_custom_call.1} parent=5 // pred_fallthru
        _
      %p331 = scmp.lt.s32.totalorder %s23, 2
      // Predicated region
      $region49: #{tpu_custom_call.1} parent=5 // pred_check
        %p332 = pneg %p331
      $region50: #{tpu_custom_call.1} parent=5 // pred_check_branch
        %334 = sbr.rel (%p332) target = $region52
      $region51: #{tpu_custom_call.1} parent=5 // pred_region
        _
      $region52: #{tpu_custom_call.1} parent=5 // pred_fallthru
        _
      %p335 = scmp.le.s32.totalorder 1, %s23
      %p336 = scmp.lt.s32.totalorder %s23, 3
      %p337 = pnand %p335, %p336
      %p338 = pneg %p337
      // Predicated region
      $region53: #{tpu_custom_call.1} parent=5 // pred_check
        _
      $region54: #{tpu_custom_call.1} parent=5 // pred_check_branch
        %340 = sbr.rel (%p337) target = $region56
      $region55: #{tpu_custom_call.1} parent=5 // pred_region
        %s341 = ssub.s32 %s23, 1
        // Predicated region
        $region57: #{tpu_custom_call.1} parent=55 // pred_check
          %p342 = pneg %p128
        $region58: #{tpu_custom_call.1} parent=55 // pred_check_branch
          %344 = sbr.rel (%p342) target = $region60
        $region59: #{tpu_custom_call.1} parent=55 // pred_region
          %345 = dma.done [#allocation5], 3072
        $region60: #{tpu_custom_call.1} parent=55 // pred_fallthru
          _
        // Predicated region
        $region61: #{tpu_custom_call.1} parent=55 // pred_check
          %p346 = pneg %p170
        $region62: #{tpu_custom_call.1} parent=55 // pred_check_branch
          %348 = sbr.rel (%p346) target = $region64
        $region63: #{tpu_custom_call.1} parent=55 // pred_region
          %349 = dma.done [#allocation8], 1024
        $region64: #{tpu_custom_call.1} parent=55 // pred_fallthru
          _
        // Predicated region
        $region65: #{tpu_custom_call.1} parent=55 // pred_check
          %p350 = pneg %p212
        $region66: #{tpu_custom_call.1} parent=55 // pred_check_branch
          %352 = sbr.rel (%p350) target = $region68
        $region67: #{tpu_custom_call.1} parent=55 // pred_region
          %353 = dma.done [#allocation8], 1024
        $region68: #{tpu_custom_call.1} parent=55 // pred_fallthru
          _
        %p354 = pneg %p44
        %p355 = pneg %p41
        %p356 = pneg %p65
        %p357 = pneg %p62
        %p358 = pneg %p86
        %p359 = pneg %p83
        %p360 = pneg %p107
        %p361 = pneg %p104
        %p362 = pneg %p128
        %p363 = pneg %p125
        %p364 = pneg %p149
        %p365 = pneg %p146
        %p366 = pneg %p170
        %p367 = pneg %p167
        %p368 = pneg %p191
        %p369 = pneg %p188
        %p370 = pneg %p212
        %p371 = pneg %p209
        %p372 = pneg %p238
        %p373 = pneg %p235
        %s374 = sand.u32 %s225, 1
        %s375 = scalar_lea.sflag [#allocation6], %s374
        %s376 = sand.u32 %s225, 1
        %s377 = smul.addr %s376, 32
        %s378 = scalar_lea.vmem [#allocation10], %s377
        %p379 = pneg %p259
        %p380 = pneg %p256
        %s381 = smul.u32 4, %s28
        %p383 = scmp.eq.s32.totalorder %s28, 0
        // Predicated region
        $region69: #{tpu_custom_call.1} parent=55 // pred_check
          %p384 = pneg %p383
        $region70: #{tpu_custom_call.1} parent=55 // pred_check_branch
          %386 = sbr.rel (%p384) target = $region72
        $region71: #{tpu_custom_call.1} parent=55 // pred_region
          %v387 = vld [vmem:[%s0] sm:$0xf]
          %v388 = vld [vmem:[%s0 + $0x4] sm:$0xf]
          %v389 = vld [vmem:[%s0 + $0x8] sm:$0xf]
          %v390 = vld [vmem:[%s0 + $0xc] sm:$0xf]
          %v391 = vld [vmem:[%s0 + $0x10] sm:$0xf]
          %v392 = vld [vmem:[%s0 + $0x14] sm:$0xf]
          %v393 = vld [vmem:[%s0 + $0x18] sm:$0xf]
          %v394 = vld [vmem:[%s0 + $0x1c] sm:$0xf]
          %v395 = vld [vmem:[%s2] sm:$0xff]
          %v396 = vld [vmem:[%s2 + $0x8] sm:$0xf]
          %v397 = vld [vmem:[%s2 + $0xc] sm:$0x77]
          %v398 = vld [vmem:[%s2 + $0x14] sm:$0x7]
          %v399 = vld [vmem:[%s3] sm:$0x7]
          %v401 = vlaneseq
          %v402 = vshrl.u32 %v401, 7
          %v403 = vsub.s32 0, %v402
          %v404 = vrot.slane %v399, %v403
          %v405 = vlaneseq
          %v406 = vshrl.u32 %v405, 7
          %v407 = vsub.s32 1, %v406
          %v408 = vrot.slane %v399, %v407
          %v409 = vlaneseq
          %v410 = vshrl.u32 %v409, 7
          %v411 = vsub.s32 2, %v410
          %v412 = vrot.slane %v399, %v411
          %v424 = vunpack.c.l.b16 %v387
          %v425 = vunpack.c.l.b16 %v388
          %v426 = vunpack.c.l.b16 %v389
          %v427 = vunpack.c.l.b16 %v390
          %v428 = vunpack.c.l.b16 %v391
          %v429 = vunpack.c.l.b16 %v392
          %v430 = vunpack.c.l.b16 %v393
          %v431 = vunpack.c.l.b16 %v394
          %v432 = vpack.c.b16 %v425, %v424
          %v433 = vpack.c.b16 %v427, %v426
          %v434 = vpack.c.b16 %v429, %v428
          %v435 = vpack.c.b16 %v431, %v430
          %v440 = vunpack.c.l.b16 %v395
          %v441 = vunpack.c.h.b16 %v395
          %v442 = vunpack.c.l.b16 %v396
          %v443 = vunpack.c.l.b16 %v397
          %v444 = vunpack.c.h.b16 %v397
          %v445 = vunpack.c.l.b16 %v398
          %v446 = vpack.c.b16 %v443, %v440
          %v447 = vpack.c.b16 %v444, %v441
          %v448 = vpack.c.b16 %v445, %v442
          %vm449 = vcmask 113664
          %v451 = vsel %vm449, %v432, 0
          %v454 = vsel %vm449, %v433, 0
          %v457 = vsel %vm449, %v434, 0
          %v460 = vsel %vm449, %v435, 0
          %vm462 = vcmask 1046528
          %v464 = vsel %vm462, %v446, 0
          %v467 = vsel %vm462, %v447, 0
          %v470 = vsel %vm462, %v448, 0
          %472 = vmatprep.subr.bf16.mxu0 0
          %473 = vmatpush1.bf16.msra.mxu0 0
          %474 = vmatprep.subr.bf16.mxu0 0
          %475 = vmatpush1.bf16.msra.mxu0 0
          %476 = vmatprep.subr.bf16.mxu0 0
          %477 = vmatpush1.bf16.msra.mxu0 0
          %478 = vmatprep.subr.bf16.mxu0 0
          %479 = vmatpush1.bf16.msra.mxu0 0
          %480 = vmatprep.subr.bf16.mxu0 0
          %481 = vmatpush1.bf16.msra.mxu0 0
          %482 = vmatprep.subr.bf16.mxu0 0
          %483 = vmatpush1.bf16.msra.mxu0 0
          %484 = vmatprep.subr.bf16.mxu0 0
          %485 = vmatpush1.bf16.msra.mxu0 0
          %486 = vmatprep.subr.bf16.mxu0 %v467
          %487 = vmatpush1.bf16.msra.mxu0 %v464
          %488 = vmatprep.subr.bf16.mxu0 0
          %489 = vmatpush2.bf16.msra.mxu0 0
          %490 = vmatprep.subr.bf16.mxu0 0
          %491 = vmatpush2.bf16.msra.mxu0 0
          %492 = vmatprep.subr.bf16.mxu0 0
          %493 = vmatpush2.bf16.msra.mxu0 0
          %494 = vmatprep.subr.bf16.mxu0 0
          %495 = vmatpush2.bf16.msra.mxu0 0
          %496 = vmatprep.subr.bf16.mxu0 0
          %497 = vmatpush2.bf16.msra.mxu0 0
          %498 = vmatprep.subr.bf16.mxu0 0
          %499 = vmatpush2.bf16.msra.mxu0 0
          %500 = vmatprep.subr.bf16.mxu0 0
          %501 = vmatpush2.bf16.msra.mxu0 0
          %502 = vmatprep.subr.bf16.mxu0 0
          %503 = vmatpush2.bf16.msra.mxu0 0
          %504 = vmatprep.mubr.bf16.mxu0 0
          %505 = vmatmul.mubr.bf16.gmra.mxu0 %v451
          %v506 = vpop.f32.mrf.mxu0
          %v507 = vadd.f32 %v404, %v506
          %v508 = vpop.f32.mrf.mxu0
          %v509 = vadd.f32 %v408, %v508
          %v510 = vpop.f32.mrf.mxu0
          %v511 = vadd.f32 %v404, %v510
          %v512 = vpop.f32.mrf.mxu0
          %v513 = vadd.f32 %v408, %v512
          %514 = vmatprep.mubr.bf16.mxu0 0
          %515 = vmatmul.mubr.bf16.gmra.mxu0 %v454
          %v516 = vpop.f32.mrf.mxu0
          %v517 = vadd.f32 %v404, %v516
          %v518 = vpop.f32.mrf.mxu0
          %v519 = vadd.f32 %v408, %v518
          %v520 = vpop.f32.mrf.mxu0
          %v521 = vadd.f32 %v404, %v520
          %v522 = vpop.f32.mrf.mxu0
          %v523 = vadd.f32 %v408, %v522
          %524 = vmatprep.mubr.bf16.mxu0 0
          %525 = vmatmul.mubr.bf16.gmra.mxu0 %v457
          %v526 = vpop.f32.mrf.mxu0
          %v527 = vadd.f32 %v404, %v526
          %v528 = vpop.f32.mrf.mxu0
          %v529 = vadd.f32 %v408, %v528
          %v530 = vpop.f32.mrf.mxu0
          %v531 = vadd.f32 %v404, %v530
          %v532 = vpop.f32.mrf.mxu0
          %v533 = vadd.f32 %v408, %v532
          %534 = vmatprep.mubr.bf16.mxu0 0
          %535 = vmatmul.mubr.bf16.gmra.mxu0 %v460
          %v536 = vpop.f32.mrf.mxu0
          %v537 = vadd.f32 %v404, %v536
          %v538 = vpop.f32.mrf.mxu0
          %v539 = vadd.f32 %v408, %v538
          %v540 = vpop.f32.mrf.mxu0
          %v541 = vadd.f32 %v404, %v540
          %v542 = vpop.f32.mrf.mxu0
          %v543 = vadd.f32 %v408, %v542
          %544 = vdwg.mxu0
          %545 = vmatprep.subr.bf16.mxu0 0
          %546 = vmatpush1.bf16.msra.mxu0 0
          %547 = vmatprep.subr.bf16.mxu0 0
          %548 = vmatpush1.bf16.msra.mxu0 0
          %549 = vmatprep.subr.bf16.mxu0 0
          %550 = vmatpush1.bf16.msra.mxu0 0
          %551 = vmatprep.subr.bf16.mxu0 0
          %552 = vmatpush1.bf16.msra.mxu0 0
          %553 = vmatprep.subr.bf16.mxu0 0
          %554 = vmatpush1.bf16.msra.mxu0 0
          %555 = vmatprep.subr.bf16.mxu0 0
          %556 = vmatpush1.bf16.msra.mxu0 0
          %557 = vmatprep.subr.bf16.mxu0 0
          %558 = vmatpush1.bf16.msra.mxu0 0
          %559 = vmatprep.subr.bf16.mxu0 0
          %560 = vmatpush1.bf16.msra.mxu0 %v470
          %561 = vmatprep.subr.bf16.mxu0 0
          %562 = vmatpush2.bf16.msra.mxu0 0
          %563 = vmatprep.subr.bf16.mxu0 0
          %564 = vmatpush2.bf16.msra.mxu0 0
          %565 = vmatprep.subr.bf16.mxu0 0
          %566 = vmatpush2.bf16.msra.mxu0 0
          %567 = vmatprep.subr.bf16.mxu0 0
          %568 = vmatpush2.bf16.msra.mxu0 0
          %569 = vmatprep.subr.bf16.mxu0 0
          %570 = vmatpush2.bf16.msra.mxu0 0
          %571 = vmatprep.subr.bf16.mxu0 0
          %572 = vmatpush2.bf16.msra.mxu0 0
          %573 = vmatprep.subr.bf16.mxu0 0
          %574 = vmatpush2.bf16.msra.mxu0 0
          %575 = vmatprep.subr.bf16.mxu0 0
          %576 = vmatpush2.bf16.msra.mxu0 0
          %577 = vmatprep.mubr.bf16.mxu0 0
          %578 = vmatmul.mubr.bf16.gmra.mxu0 %v451
          %v579 = vpop.f32.mrf.mxu0
          %v580 = vadd.f32 %v412, %v579
          %v581 = vpop.f32.mrf.mxu0
          %v582 = vpop.f32.mrf.mxu0
          %v583 = vadd.f32 %v412, %v582
          %v584 = vpop.f32.mrf.mxu0
          %585 = vmatprep.mubr.bf16.mxu0 0
          %586 = vmatmul.mubr.bf16.gmra.mxu0 %v454
          %v587 = vpop.f32.mrf.mxu0
          %v588 = vadd.f32 %v412, %v587
          %v589 = vpop.f32.mrf.mxu0
          %v590 = vpop.f32.mrf.mxu0
          %v591 = vadd.f32 %v412, %v590
          %v592 = vpop.f32.mrf.mxu0
          %593 = vmatprep.mubr.bf16.mxu0 0
          %594 = vmatmul.mubr.bf16.gmra.mxu0 %v457
          %v595 = vpop.f32.mrf.mxu0
          %v596 = vadd.f32 %v412, %v595
          %v597 = vpop.f32.mrf.mxu0
          %v598 = vpop.f32.mrf.mxu0
          %v599 = vadd.f32 %v412, %v598
          %v600 = vpop.f32.mrf.mxu0
          %601 = vmatprep.mubr.bf16.mxu0 0
          %602 = vmatmul.mubr.bf16.gmra.mxu0 %v460
          %v603 = vpop.f32.mrf.mxu0
          %v604 = vadd.f32 %v412, %v603
          %v605 = vpop.f32.mrf.mxu0
          %v606 = vpop.f32.mrf.mxu0
          %v607 = vadd.f32 %v412, %v606
          %v608 = vpop.f32.mrf.mxu0
          %609 = vdwg.mxu0
          %v610 = vpack.c.bf16 %v511, %v507
          %v611 = vpack.c.bf16 %v513, %v509
          %v612 = vpack.c.bf16 %v583, %v580
          %v613 = vpack.c.bf16 %v521, %v517
          %v614 = vpack.c.bf16 %v523, %v519
          %v615 = vpack.c.bf16 %v591, %v588
          %v616 = vpack.c.bf16 %v531, %v527
          %v617 = vpack.c.bf16 %v533, %v529
          %v618 = vpack.c.bf16 %v599, %v596
          %v619 = vpack.c.bf16 %v541, %v537
          %v620 = vpack.c.bf16 %v543, %v539
          %v621 = vpack.c.bf16 %v607, %v604
          %v634 = vunpack.c.l.b16 %v610
          %v635 = vunpack.c.l.b16 %v611
          %v636 = vunpack.c.l.b16 %v612
          %v637 = vunpack.c.h.b16 %v610
          %v638 = vunpack.c.h.b16 %v611
          %v639 = vunpack.c.h.b16 %v612
          %v640 = vunpack.c.l.b16 %v613
          %v641 = vunpack.c.l.b16 %v614
          %v642 = vunpack.c.l.b16 %v615
          %v643 = vunpack.c.h.b16 %v613
          %v644 = vunpack.c.h.b16 %v614
          %v645 = vunpack.c.h.b16 %v615
          %v646 = vunpack.c.l.b16 %v616
          %v647 = vunpack.c.l.b16 %v617
          %v648 = vunpack.c.l.b16 %v618
          %v649 = vunpack.c.h.b16 %v616
          %v650 = vunpack.c.h.b16 %v617
          %v651 = vunpack.c.h.b16 %v618
          %v652 = vunpack.c.l.b16 %v619
          %v653 = vunpack.c.l.b16 %v620
          %v654 = vunpack.c.l.b16 %v621
          %v655 = vunpack.c.h.b16 %v619
          %v656 = vunpack.c.h.b16 %v620
          %v657 = vunpack.c.h.b16 %v621
          %v658 = vpack.c.b16 %v635, %v634
          %v659 = vpack.c.b16 %v636, %v636
          %v660 = vpack.c.b16 %v638, %v637
          %v661 = vpack.c.b16 %v639, %v639
          %v662 = vpack.c.b16 %v641, %v640
          %v663 = vpack.c.b16 %v642, %v642
          %v664 = vpack.c.b16 %v644, %v643
          %v665 = vpack.c.b16 %v645, %v645
          %v666 = vpack.c.b16 %v647, %v646
          %v667 = vpack.c.b16 %v648, %v648
          %v668 = vpack.c.b16 %v650, %v649
          %v669 = vpack.c.b16 %v651, %v651
          %v670 = vpack.c.b16 %v653, %v652
          %v671 = vpack.c.b16 %v654, %v654
          %v672 = vpack.c.b16 %v656, %v655
          %v673 = vpack.c.b16 %v657, %v657
          %690 = vst [vmem:[#allocation2] sm:$0xff] %v658
          %691 = vst [vmem:[#allocation2 + $0x8] sm:$0xf] %v659
          %692 = vst [vmem:[#allocation2 + $0xc] sm:$0xff] %v660
          %693 = vst [vmem:[#allocation2 + $0x14] sm:$0xf] %v661
          %694 = vst [vmem:[#allocation2 + $0x18] sm:$0xff] %v662
          %695 = vst [vmem:[#allocation2 + $0x20] sm:$0xf] %v663
          %696 = vst [vmem:[#allocation2 + $0x24] sm:$0xff] %v664
          %697 = vst [vmem:[#allocation2 + $0x2c] sm:$0xf] %v665
          %698 = vst [vmem:[#allocation2 + $0x30] sm:$0xff] %v666
          %699 = vst [vmem:[#allocation2 + $0x38] sm:$0xf] %v667
          %700 = vst [vmem:[#allocation2 + $0x3c] sm:$0xff] %v668
          %701 = vst [vmem:[#allocation2 + $0x44] sm:$0xf] %v669
          %702 = vst [vmem:[#allocation2 + $0x48] sm:$0xff] %v670
          %703 = vst [vmem:[#allocation2 + $0x50] sm:$0xf] %v671
          %704 = vst [vmem:[#allocation2 + $0x54] sm:$0xff] %v672
          %705 = vst [vmem:[#allocation2 + $0x5c] sm:$0xf] %v673
          %v706 = vld [vmem:[#allocation4] sm:$0xff]
          %v707 = vld [vmem:[#allocation4 + $0x8] sm:$0xf]
          %v708 = vld [vmem:[#allocation4 + $0xc] sm:$0xff]
          %v709 = vld [vmem:[#allocation4 + $0x14] sm:$0xf]
          %v710 = vld [vmem:[#allocation4 + $0x18] sm:$0xff]
          %v711 = vld [vmem:[#allocation4 + $0x20] sm:$0xf]
          %v712 = vld [vmem:[#allocation4 + $0x24] sm:$0xff]
          %v713 = vld [vmem:[#allocation4 + $0x2c] sm:$0xf]
          %v714 = vld [vmem:[#allocation4 + $0x30] sm:$0xff]
          %v715 = vld [vmem:[#allocation4 + $0x38] sm:$0xf]
          %v716 = vld [vmem:[#allocation4 + $0x3c] sm:$0xff]
          %v717 = vld [vmem:[#allocation4 + $0x44] sm:$0xf]
          %v718 = vld [vmem:[#allocation4 + $0x48] sm:$0xff]
          %v719 = vld [vmem:[#allocation4 + $0x50] sm:$0xf]
          %v720 = vld [vmem:[#allocation4 + $0x54] sm:$0xff]
          %v721 = vld [vmem:[#allocation4 + $0x5c] sm:$0xf]
          %v722 = vld [vmem:[#allocation4 + $0x60] sm:$0xff]
          %v723 = vld [vmem:[#allocation4 + $0x68] sm:$0xf]
          %v724 = vld [vmem:[#allocation4 + $0x6c] sm:$0xff]
          %v725 = vld [vmem:[#allocation4 + $0x74] sm:$0xf]
          %v726 = vld [vmem:[#allocation4 + $0x78] sm:$0xff]
          %v727 = vld [vmem:[#allocation4 + $0x80] sm:$0xf]
          %v728 = vld [vmem:[#allocation4 + $0x84] sm:$0xff]
          %v729 = vld [vmem:[#allocation4 + $0x8c] sm:$0xf]
          %v730 = vld [vmem:[#allocation4 + $0x90] sm:$0xff]
          %v731 = vld [vmem:[#allocation4 + $0x98] sm:$0xf]
          %v732 = vld [vmem:[#allocation4 + $0x9c] sm:$0xff]
          %v733 = vld [vmem:[#allocation4 + $0xa4] sm:$0xf]
          %v734 = vld [vmem:[#allocation4 + $0xa8] sm:$0xff]
          %v735 = vld [vmem:[#allocation4 + $0xb0] sm:$0xf]
          %v736 = vld [vmem:[#allocation4 + $0xb4] sm:$0xff]
          %v737 = vld [vmem:[#allocation4 + $0xbc] sm:$0xf]
          %v738 = vld [vmem:[%s5] sm:$0x7]
          %v739 = vld [vmem:[%s1] sm:$0xff]
          %740 = vset.pattern.permute.xlu0 0
          %741 = vperm.xlu0 %740, %v739
          %v742 = vpop.permute.xlu0 %741
          %s743 = smul.u32 0, 3
          %s744 = smul.addr %s743, 4
          %s745 = scalar_lea.vmem [#allocation2], %s744
          %v746 = vld [vmem:[%s745] sm:$0xff]
          %v747 = vld [vmem:[%s745 + $0x8] sm:$0xf]
          %v748 = vunpack.c.l.bf16 %v746
          %v749 = vunpack.c.h.bf16 %v746
          %v750 = vunpack.c.l.bf16 %v747
          %v752 = vlaneseq
          %v753 = vshrl.u32 %v752, 7
          %v754 = vsub.s32 0, %v753
          %v755 = vrot.slane %v738, %v754
          %v756 = vlaneseq
          %v757 = vshrl.u32 %v756, 7
          %v758 = vsub.s32 1, %v757
          %v759 = vrot.slane %v738, %v758
          %v760 = vlaneseq
          %v761 = vshrl.u32 %v760, 7
          %v762 = vsub.s32 2, %v761
          %v763 = vrot.slane %v738, %v762
          %v799 = vunpack.c.l.b16 %v706
          %v800 = vunpack.c.h.b16 %v706
          %v801 = vunpack.c.l.b16 %v707
          %v802 = vunpack.c.l.b16 %v708
          %v803 = vunpack.c.h.b16 %v708
          %v804 = vunpack.c.l.b16 %v709
          %v805 = vunpack.c.l.b16 %v710
          %v806 = vunpack.c.h.b16 %v710
          %v807 = vunpack.c.l.b16 %v711
          %v808 = vunpack.c.l.b16 %v712
          %v809 = vunpack.c.h.b16 %v712
          %v810 = vunpack.c.l.b16 %v713
          %v811 = vunpack.c.l.b16 %v714
          %v812 = vunpack.c.h.b16 %v714
          %v813 = vunpack.c.l.b16 %v715
          %v814 = vunpack.c.l.b16 %v716
          %v815 = vunpack.c.h.b16 %v716
          %v816 = vunpack.c.l.b16 %v717
          %v817 = vunpack.c.l.b16 %v718
          %v818 = vunpack.c.h.b16 %v718
          %v819 = vunpack.c.l.b16 %v719
          %v820 = vunpack.c.l.b16 %v720
          %v821 = vunpack.c.h.b16 %v720
          %v822 = vunpack.c.l.b16 %v721
          %v823 = vunpack.c.l.b16 %v722
          %v824 = vunpack.c.h.b16 %v722
          %v825 = vunpack.c.l.b16 %v723
          %v826 = vunpack.c.l.b16 %v724
          %v827 = vunpack.c.h.b16 %v724
          %v828 = vunpack.c.l.b16 %v725
          %v829 = vunpack.c.l.b16 %v726
          %v830 = vunpack.c.h.b16 %v726
          %v831 = vunpack.c.l.b16 %v727
          %v832 = vunpack.c.l.b16 %v728
          %v833 = vunpack.c.h.b16 %v728
          %v834 = vunpack.c.l.b16 %v729
          %v835 = vunpack.c.l.b16 %v730
          %v836 = vunpack.c.h.b16 %v730
          %v837 = vunpack.c.l.b16 %v731
          %v838 = vunpack.c.l.b16 %v732
          %v839 = vunpack.c.h.b16 %v732
          %v840 = vunpack.c.l.b16 %v733
          %v841 = vunpack.c.l.b16 %v734
          %v842 = vunpack.c.h.b16 %v734
          %v843 = vunpack.c.l.b16 %v735
          %v844 = vunpack.c.l.b16 %v736
          %v845 = vunpack.c.h.b16 %v736
          %v846 = vunpack.c.l.b16 %v737
          %v847 = vpack.c.b16 %v802, %v799
          %v848 = vpack.c.b16 %v803, %v800
          %v849 = vpack.c.b16 %v804, %v801
          %v850 = vpack.c.b16 %v808, %v805
          %v851 = vpack.c.b16 %v809, %v806
          %v852 = vpack.c.b16 %v810, %v807
          %v853 = vpack.c.b16 %v814, %v811
          %v854 = vpack.c.b16 %v815, %v812
          %v855 = vpack.c.b16 %v816, %v813
          %v856 = vpack.c.b16 %v820, %v817
          %v857 = vpack.c.b16 %v821, %v818
          %v858 = vpack.c.b16 %v822, %v819
          %v859 = vpack.c.b16 %v826, %v823
          %v860 = vpack.c.b16 %v827, %v824
          %v861 = vpack.c.b16 %v828, %v825
          %v862 = vpack.c.b16 %v832, %v829
          %v863 = vpack.c.b16 %v833, %v830
          %v864 = vpack.c.b16 %v834, %v831
          %v865 = vpack.c.b16 %v838, %v835
          %v866 = vpack.c.b16 %v839, %v836
          %v867 = vpack.c.b16 %v840, %v837
          %v868 = vpack.c.b16 %v844, %v841
          %v869 = vpack.c.b16 %v845, %v842
          %v870 = vpack.c.b16 %v846, %v843
          %895 = vmatprep.subr.bf16.mxu0 %v869
          %896 = vmatpush1.bf16.msra.mxu0 %v868
          %897 = vmatprep.subr.bf16.mxu0 %v866
          %898 = vmatpush1.bf16.msra.mxu0 %v865
          %899 = vmatprep.subr.bf16.mxu0 %v863
          %900 = vmatpush1.bf16.msra.mxu0 %v862
          %901 = vmatprep.subr.bf16.mxu0 %v860
          %902 = vmatpush1.bf16.msra.mxu0 %v859
          %903 = vmatprep.subr.bf16.mxu0 %v857
          %904 = vmatpush1.bf16.msra.mxu0 %v856
          %905 = vmatprep.subr.bf16.mxu0 %v854
          %906 = vmatpush1.bf16.msra.mxu0 %v853
          %907 = vmatprep.subr.bf16.mxu0 %v851
          %908 = vmatpush1.bf16.msra.mxu0 %v850
          %909 = vmatprep.subr.bf16.mxu0 %v848
          %910 = vmatpush1.bf16.msra.mxu0 %v847
          %911 = vmatprep.subr.bf16.mxu0 0
          %912 = vmatpush2.bf16.msra.mxu0 0
          %913 = vmatprep.subr.bf16.mxu0 0
          %914 = vmatpush2.bf16.msra.mxu0 0
          %915 = vmatprep.subr.bf16.mxu0 0
          %916 = vmatpush2.bf16.msra.mxu0 0
          %917 = vmatprep.subr.bf16.mxu0 0
          %918 = vmatpush2.bf16.msra.mxu0 0
          %919 = vmatprep.subr.bf16.mxu0 0
          %920 = vmatpush2.bf16.msra.mxu0 0
          %921 = vmatprep.subr.bf16.mxu0 0
          %922 = vmatpush2.bf16.msra.mxu0 0
          %923 = vmatprep.subr.bf16.mxu0 0
          %924 = vmatpush2.bf16.msra.mxu0 0
          %925 = vmatprep.subr.bf16.mxu0 0
          %926 = vmatpush2.bf16.msra.mxu0 0
          %927 = vmatprep.mubr.bf16.mxu0 0
          %928 = vmatmul.mubr.bf16.gmra.mxu0 0
          %v929 = vpop.f32.mrf.mxu0
          %v930 = vadd.f32 %v755, %v929
          %v931 = vpop.f32.mrf.mxu0
          %v932 = vadd.f32 %v759, %v931
          %v933 = vpop.f32.mrf.mxu0
          %v934 = vpop.f32.mrf.mxu0
          %935 = vdwg.mxu0
          %936 = vmatprep.subr.bf16.mxu0 0
          %937 = vmatpush1.bf16.msra.mxu0 %v870
          %938 = vmatprep.subr.bf16.mxu0 0
          %939 = vmatpush1.bf16.msra.mxu0 %v867
          %940 = vmatprep.subr.bf16.mxu0 0
          %941 = vmatpush1.bf16.msra.mxu0 %v864
          %942 = vmatprep.subr.bf16.mxu0 0
          %943 = vmatpush1.bf16.msra.mxu0 %v861
          %944 = vmatprep.subr.bf16.mxu0 0
          %945 = vmatpush1.bf16.msra.mxu0 %v858
          %946 = vmatprep.subr.bf16.mxu0 0
          %947 = vmatpush1.bf16.msra.mxu0 %v855
          %948 = vmatprep.subr.bf16.mxu0 0
          %949 = vmatpush1.bf16.msra.mxu0 %v852
          %950 = vmatprep.subr.bf16.mxu0 0
          %951 = vmatpush1.bf16.msra.mxu0 %v849
          %952 = vmatprep.subr.bf16.mxu0 0
          %953 = vmatpush2.bf16.msra.mxu0 0
          %954 = vmatprep.subr.bf16.mxu0 0
          %955 = vmatpush2.bf16.msra.mxu0 0
          %956 = vmatprep.subr.bf16.mxu0 0
          %957 = vmatpush2.bf16.msra.mxu0 0
          %958 = vmatprep.subr.bf16.mxu0 0
          %959 = vmatpush2.bf16.msra.mxu0 0
          %960 = vmatprep.subr.bf16.mxu0 0
          %961 = vmatpush2.bf16.msra.mxu0 0
          %962 = vmatprep.subr.bf16.mxu0 0
          %963 = vmatpush2.bf16.msra.mxu0 0
          %964 = vmatprep.subr.bf16.mxu0 0
          %965 = vmatpush2.bf16.msra.mxu0 0
          %966 = vmatprep.subr.bf16.mxu0 0
          %967 = vmatpush2.bf16.msra.mxu0 0
          %968 = vmatprep.mubr.bf16.mxu0 0
          %969 = vmatmul.mubr.bf16.gmra.mxu0 0
          %v970 = vpop.f32.mrf.mxu0
          %v971 = vadd.f32 %v763, %v970
          %v972 = vpop.f32.mrf.mxu0
          %v973 = vpop.f32.mrf.mxu0
          %v974 = vpop.f32.mrf.mxu0
          %975 = vdwg.mxu0
          %v976 = vadd.f32 %v748, %v930
          %v977 = vxor.u32 %v976, 2147483648
          %v978 = vmul.f32 %v977, 1.442695
          %v979 = vpow.pop %v978
          %v980 = vadd.f32 %v979, 1.0
          %v981 = vrcp.pop %v980
          %v982 = vmul.f32 1.0, %v981
          %v983 = vadd.f32 %v749, %v932
          %v984 = vxor.u32 %v983, 2147483648
          %v985 = vmul.f32 %v984, 1.442695
          %v986 = vpow.pop %v985
          %v987 = vadd.f32 %v986, 1.0
          %v988 = vrcp.pop %v987
          %v989 = vmul.f32 1.0, %v988
          %v990 = vmul.f32 %v982, %v971
          %v991 = vadd.f32 %v750, %v990
          %v992 = vtanh.pop %v991
          %v993 = vsub.f32 1.0, %v989
          %v994 = vmul.f32 %v993, %v992
          %v995 = vmul.f32 %v989, 0.0
          %v996 = vadd.f32 %v994, %v995
          %vm997 = vcmp.gt.s32.totalorder %v742, 0
          %v998 = vsel %vm997, %v996, 0.0
          %v999 = vpack.c.bf16 %v998, %v998
          %1000 = vst [vmem:[#allocation3] sm:$0xf] %v999
          %s1001 = smul.u32 1, 3
          %s1002 = smul.addr %s1001, 4
          %s1003 = scalar_lea.vmem [#allocation2], %s1002
          %v1004 = vld [vmem:[%s1003] sm:$0xff]
          %v1005 = vld [vmem:[%s1003 + $0x8] sm:$0xf]
          %v1006 = vunpack.c.l.bf16 %v1004
          %v1007 = vunpack.c.h.bf16 %v1004
          %v1008 = vunpack.c.l.bf16 %v1005
          %1009 = vmatprep.subr.bf16.mxu0 %v869
          %1010 = vmatpush1.bf16.msra.mxu0 %v868
          %1011 = vmatprep.subr.bf16.mxu0 %v866
          %1012 = vmatpush1.bf16.msra.mxu0 %v865
          %1013 = vmatprep.subr.bf16.mxu0 %v863
          %1014 = vmatpush1.bf16.msra.mxu0 %v862
          %1015 = vmatprep.subr.bf16.mxu0 %v860
          %1016 = vmatpush1.bf16.msra.mxu0 %v859
          %1017 = vmatprep.subr.bf16.mxu0 %v857
          %1018 = vmatpush1.bf16.msra.mxu0 %v856
          %1019 = vmatprep.subr.bf16.mxu0 %v854
          %1020 = vmatpush1.bf16.msra.mxu0 %v853
          %1021 = vmatprep.subr.bf16.mxu0 %v851
          %1022 = vmatpush1.bf16.msra.mxu0 %v850
          %1023 = vmatprep.subr.bf16.mxu0 %v848
          %1024 = vmatpush1.bf16.msra.mxu0 %v847
          %1025 = vmatprep.subr.bf16.mxu0 0
          %1026 = vmatpush2.bf16.msra.mxu0 0
          %1027 = vmatprep.subr.bf16.mxu0 0
          %1028 = vmatpush2.bf16.msra.mxu0 0
          %1029 = vmatprep.subr.bf16.mxu0 0
          %1030 = vmatpush2.bf16.msra.mxu0 0
          %1031 = vmatprep.subr.bf16.mxu0 0
          %1032 = vmatpush2.bf16.msra.mxu0 0
          %1033 = vmatprep.subr.bf16.mxu0 0
          %1034 = vmatpush2.bf16.msra.mxu0 0
          %1035 = vmatprep.subr.bf16.mxu0 0
          %1036 = vmatpush2.bf16.msra.mxu0 0
          %1037 = vmatprep.subr.bf16.mxu0 0
          %1038 = vmatpush2.bf16.msra.mxu0 0
          %1039 = vmatprep.subr.bf16.mxu0 0
          %1040 = vmatpush2.bf16.msra.mxu0 0
          %1041 = vmatprep.mubr.bf16.mxu0 0
          %1042 = vmatmul.mubr.bf16.gmra.mxu0 %v999
          %v1043 = vpop.f32.mrf.mxu0
          %v1044 = vadd.f32 %v755, %v1043
          %v1045 = vpop.f32.mrf.mxu0
          %v1046 = vadd.f32 %v759, %v1045
          %v1047 = vpop.f32.mrf.mxu0
          %v1048 = vpop.f32.mrf.mxu0
          %1049 = vdwg.mxu0
          %1050 = vmatprep.subr.bf16.mxu0 0
          %1051 = vmatpush1.bf16.msra.mxu0 %v870
          %1052 = vmatprep.subr.bf16.mxu0 0
          %1053 = vmatpush1.bf16.msra.mxu0 %v867
          %1054 = vmatprep.subr.bf16.mxu0 0
          %1055 = vmatpush1.bf16.msra.mxu0 %v864
          %1056 = vmatprep.subr.bf16.mxu0 0
          %1057 = vmatpush1.bf16.msra.mxu0 %v861
          %1058 = vmatprep.subr.bf16.mxu0 0
          %1059 = vmatpush1.bf16.msra.mxu0 %v858
          %1060 = vmatprep.subr.bf16.mxu0 0
          %1061 = vmatpush1.bf16.msra.mxu0 %v855
          %1062 = vmatprep.subr.bf16.mxu0 0
          %1063 = vmatpush1.bf16.msra.mxu0 %v852
          %1064 = vmatprep.subr.bf16.mxu0 0
          %1065 = vmatpush1.bf16.msra.mxu0 %v849
          %1066 = vmatprep.subr.bf16.mxu0 0
          %1067 = vmatpush2.bf16.msra.mxu0 0
          %1068 = vmatprep.subr.bf16.mxu0 0
          %1069 = vmatpush2.bf16.msra.mxu0 0
          %1070 = vmatprep.subr.bf16.mxu0 0
          %1071 = vmatpush2.bf16.msra.mxu0 0
          %1072 = vmatprep.subr.bf16.mxu0 0
          %1073 = vmatpush2.bf16.msra.mxu0 0
          %1074 = vmatprep.subr.bf16.mxu0 0
          %1075 = vmatpush2.bf16.msra.mxu0 0
          %1076 = vmatprep.subr.bf16.mxu0 0
          %1077 = vmatpush2.bf16.msra.mxu0 0
          %1078 = vmatprep.subr.bf16.mxu0 0
          %1079 = vmatpush2.bf16.msra.mxu0 0
          %1080 = vmatprep.subr.bf16.mxu0 0
          %1081 = vmatpush2.bf16.msra.mxu0 0
          %1082 = vmatprep.mubr.bf16.mxu0 0
          %1083 = vmatmul.mubr.bf16.gmra.mxu0 %v999
          %v1084 = vpop.f32.mrf.mxu0
          %v1085 = vadd.f32 %v763, %v1084
          %v1086 = vpop.f32.mrf.mxu0
          %v1087 = vpop.f32.mrf.mxu0
          %v1088 = vpop.f32.mrf.mxu0
          %1089 = vdwg.mxu0
          %v1090 = vadd.f32 %v1006, %v1044
          %v1091 = vxor.u32 %v1090, 2147483648
          %v1092 = vmul.f32 %v1091, 1.442695
          %v1093 = vpow.pop %v1092
          %v1094 = vadd.f32 %v1093, 1.0
          %v1095 = vrcp.pop %v1094
          %v1096 = vmul.f32 1.0, %v1095
          %v1097 = vadd.f32 %v1007, %v1046
          %v1098 = vxor.u32 %v1097, 2147483648
          %v1099 = vmul.f32 %v1098, 1.442695
          %v1100 = vpow.pop %v1099
          %v1101 = vadd.f32 %v1100, 1.0
          %v1102 = vrcp.pop %v1101
          %v1103 = vmul.f32 1.0, %v1102
          %v1104 = vmul.f32 %v1096, %v1085
          %v1105 = vadd.f32 %v1008, %v1104
          %v1106 = vtanh.pop %v1105
          %v1107 = vsub.f32 1.0, %v1103
          %v1108 = vmul.f32 %v1107, %v1106
          %v1109 = vmul.f32 %v1103, %v998
          %v1110 = vadd.f32 %v1108, %v1109
          %vm1111 = vcmp.gt.s32.totalorder %v742, 1
          %v1112 = vsel %vm1111, %v1110, %v998
          %v1113 = vsel %vm1111, %v1110, 0.0
          %v1114 = vpack.c.bf16 %v1113, %v1113
          %s1115 = scalar_lea.vmem [#allocation3], 4
          %1116 = vst [vmem:[%s1115] sm:$0xf] %v1114
          %s1117 = smul.u32 2, 3
          %s1118 = smul.addr %s1117, 4
          %s1119 = scalar_lea.vmem [#allocation2], %s1118
          %v1120 = vld [vmem:[%s1119] sm:$0xff]
          %v1121 = vld [vmem:[%s1119 + $0x8] sm:$0xf]
          %v1122 = vunpack.c.l.bf16 %v1120
          %v1123 = vunpack.c.h.bf16 %v1120
          %v1124 = vunpack.c.l.bf16 %v1121
          %v1125 = vpack.c.bf16 %v1112, %v1112
          %1126 = vmatprep.subr.bf16.mxu0 %v869
          %1127 = vmatpush1.bf16.msra.mxu0 %v868
          %1128 = vmatprep.subr.bf16.mxu0 %v866
          %1129 = vmatpush1.bf16.msra.mxu0 %v865
          %1130 = vmatprep.subr.bf16.mxu0 %v863
          %1131 = vmatpush1.bf16.msra.mxu0 %v862
          %1132 = vmatprep.subr.bf16.mxu0 %v860
          %1133 = vmatpush1.bf16.msra.mxu0 %v859
          %1134 = vmatprep.subr.bf16.mxu0 %v857
          %1135 = vmatpush1.bf16.msra.mxu0 %v856
          %1136 = vmatprep.subr.bf16.mxu0 %v854
          %1137 = vmatpush1.bf16.msra.mxu0 %v853
          %1138 = vmatprep.subr.bf16.mxu0 %v851
          %1139 = vmatpush1.bf16.msra.mxu0 %v850
          %1140 = vmatprep.subr.bf16.mxu0 %v848
          %1141 = vmatpush1.bf16.msra.mxu0 %v847
          %1142 = vmatprep.subr.bf16.mxu0 0
          %1143 = vmatpush2.bf16.msra.mxu0 0
          %1144 = vmatprep.subr.bf16.mxu0 0
          %1145 = vmatpush2.bf16.msra.mxu0 0
          %1146 = vmatprep.subr.bf16.mxu0 0
          %1147 = vmatpush2.bf16.msra.mxu0 0
          %1148 = vmatprep.subr.bf16.mxu0 0
          %1149 = vmatpush2.bf16.msra.mxu0 0
          %1150 = vmatprep.subr.bf16.mxu0 0
          %1151 = vmatpush2.bf16.msra.mxu0 0
          %1152 = vmatprep.subr.bf16.mxu0 0
          %1153 = vmatpush2.bf16.msra.mxu0 0
          %1154 = vmatprep.subr.bf16.mxu0 0
          %1155 = vmatpush2.bf16.msra.mxu0 0
          %1156 = vmatprep.subr.bf16.mxu0 0
          %1157 = vmatpush2.bf16.msra.mxu0 0
          %1158 = vmatprep.mubr.bf16.mxu0 0
          %1159 = vmatmul.mubr.bf16.gmra.mxu0 %v1125
          %v1160 = vpop.f32.mrf.mxu0
          %v1161 = vadd.f32 %v755, %v1160
          %v1162 = vpop.f32.mrf.mxu0
          %v1163 = vadd.f32 %v759, %v1162
          %v1164 = vpop.f32.mrf.mxu0
          %v1165 = vpop.f32.mrf.mxu0
          %1166 = vdwg.mxu0
          %1167 = vmatprep.subr.bf16.mxu0 0
          %1168 = vmatpush1.bf16.msra.mxu0 %v870
          %1169 = vmatprep.subr.bf16.mxu0 0
          %1170 = vmatpush1.bf16.msra.mxu0 %v867
          %1171 = vmatprep.subr.bf16.mxu0 0
          %1172 = vmatpush1.bf16.msra.mxu0 %v864
          %1173 = vmatprep.subr.bf16.mxu0 0
          %1174 = vmatpush1.bf16.msra.mxu0 %v861
          %1175 = vmatprep.subr.bf16.mxu0 0
          %1176 = vmatpush1.bf16.msra.mxu0 %v858
          %1177 = vmatprep.subr.bf16.mxu0 0
          %1178 = vmatpush1.bf16.msra.mxu0 %v855
          %1179 = vmatprep.subr.bf16.mxu0 0
          %1180 = vmatpush1.bf16.msra.mxu0 %v852
          %1181 = vmatprep.subr.bf16.mxu0 0
          %1182 = vmatpush1.bf16.msra.mxu0 %v849
          %1183 = vmatprep.subr.bf16.mxu0 0
          %1184 = vmatpush2.bf16.msra.mxu0 0
          %1185 = vmatprep.subr.bf16.mxu0 0
          %1186 = vmatpush2.bf16.msra.mxu0 0
          %1187 = vmatprep.subr.bf16.mxu0 0
          %1188 = vmatpush2.bf16.msra.mxu0 0
          %1189 = vmatprep.subr.bf16.mxu0 0
          %1190 = vmatpush2.bf16.msra.mxu0 0
          %1191 = vmatprep.subr.bf16.mxu0 0
          %1192 = vmatpush2.bf16.msra.mxu0 0
          %1193 = vmatprep.subr.bf16.mxu0 0
          %1194 = vmatpush2.bf16.msra.mxu0 0
          %1195 = vmatprep.subr.bf16.mxu0 0
          %1196 = vmatpush2.bf16.msra.mxu0 0
          %1197 = vmatprep.subr.bf16.mxu0 0
          %1198 = vmatpush2.bf16.msra.mxu0 0
          %1199 = vmatprep.mubr.bf16.mxu0 0
          %1200 = vmatmul.mubr.bf16.gmra.mxu0 %v1125
          %v1201 = vpop.f32.mrf.mxu0
          %v1202 = vadd.f32 %v763, %v1201
          %v1203 = vpop.f32.mrf.mxu0
          %v1204 = vpop.f32.mrf.mxu0
          %v1205 = vpop.f32.mrf.mxu0
          %1206 = vdwg.mxu0
          %v1207 = vadd.f32 %v1122, %v1161
          %v1208 = vxor.u32 %v1207, 2147483648
          %v1209 = vmul.f32 %v1208, 1.442695
          %v1210 = vpow.pop %v1209
          %v1211 = vadd.f32 %v1210, 1.0
          %v1212 = vrcp.pop %v1211
          %v1213 = vmul.f32 1.0, %v1212
          %v1214 = vadd.f32 %v1123, %v1163
          %v1215 = vxor.u32 %v1214, 2147483648
          %v1216 = vmul.f32 %v1215, 1.442695
          %v1217 = vpow.pop %v1216
          %v1218 = vadd.f32 %v1217, 1.0
          %v1219 = vrcp.pop %v1218
          %v1220 = vmul.f32 1.0, %v1219
          %v1221 = vmul.f32 %v1213, %v1202
          %v1222 = vadd.f32 %v1124, %v1221
          %v1223 = vtanh.pop %v1222
          %v1224 = vsub.f32 1.0, %v1220
          %v1225 = vmul.f32 %v1224, %v1223
          %v1226 = vmul.f32 %v1220, %v1112
          %v1227 = vadd.f32 %v1225, %v1226
          %vm1228 = vcmp.gt.s32.totalorder %v742, 2
          %v1229 = vsel %vm1228, %v1227, %v1112
          %v1230 = vsel %vm1228, %v1227, 0.0
          %v1231 = vpack.c.bf16 %v1230, %v1230
          %s1232 = scalar_lea.vmem [#allocation3], 8
          %1233 = vst [vmem:[%s1232] sm:$0xf] %v1231
          %s1234 = smul.u32 3, 3
          %s1235 = smul.addr %s1234, 4
          %s1236 = scalar_lea.vmem [#allocation2], %s1235
          %v1237 = vld [vmem:[%s1236] sm:$0xff]
          %v1238 = vld [vmem:[%s1236 + $0x8] sm:$0xf]
          %v1239 = vunpack.c.l.bf16 %v1237
          %v1240 = vunpack.c.h.bf16 %v1237
          %v1241 = vunpack.c.l.bf16 %v1238
          %v1242 = vpack.c.bf16 %v1229, %v1229
          %1243 = vmatprep.subr.bf16.mxu0 %v869
          %1244 = vmatpush1.bf16.msra.mxu0 %v868
          %1245 = vmatprep.subr.bf16.mxu0 %v866
          %1246 = vmatpush1.bf16.msra.mxu0 %v865
          %1247 = vmatprep.subr.bf16.mxu0 %v863
          %1248 = vmatpush1.bf16.msra.mxu0 %v862
          %1249 = vmatprep.subr.bf16.mxu0 %v860
          %1250 = vmatpush1.bf16.msra.mxu0 %v859
          %1251 = vmatprep.subr.bf16.mxu0 %v857
          %1252 = vmatpush1.bf16.msra.mxu0 %v856
          %1253 = vmatprep.subr.bf16.mxu0 %v854
          %1254 = vmatpush1.bf16.msra.mxu0 %v853
          %1255 = vmatprep.subr.bf16.mxu0 %v851
          %1256 = vmatpush1.bf16.msra.mxu0 %v850
          %1257 = vmatprep.subr.bf16.mxu0 %v848
          %1258 = vmatpush1.bf16.msra.mxu0 %v847
          %1259 = vmatprep.subr.bf16.mxu0 0
          %1260 = vmatpush2.bf16.msra.mxu0 0
          %1261 = vmatprep.subr.bf16.mxu0 0
          %1262 = vmatpush2.bf16.msra.mxu0 0
          %1263 = vmatprep.subr.bf16.mxu0 0
          %1264 = vmatpush2.bf16.msra.mxu0 0
          %1265 = vmatprep.subr.bf16.mxu0 0
          %1266 = vmatpush2.bf16.msra.mxu0 0
          %1267 = vmatprep.subr.bf16.mxu0 0
          %1268 = vmatpush2.bf16.msra.mxu0 0
          %1269 = vmatprep.subr.bf16.mxu0 0
          %1270 = vmatpush2.bf16.msra.mxu0 0
          %1271 = vmatprep.subr.bf16.mxu0 0
          %1272 = vmatpush2.bf16.msra.mxu0 0
          %1273 = vmatprep.subr.bf16.mxu0 0
          %1274 = vmatpush2.bf16.msra.mxu0 0
          %1275 = vmatprep.mubr.bf16.mxu0 0
          %1276 = vmatmul.mubr.bf16.gmra.mxu0 %v1242
          %v1277 = vpop.f32.mrf.mxu0
          %v1278 = vadd.f32 %v755, %v1277
          %v1279 = vpop.f32.mrf.mxu0
          %v1280 = vadd.f32 %v759, %v1279
          %v1281 = vpop.f32.mrf.mxu0
          %v1282 = vpop.f32.mrf.mxu0
          %1283 = vdwg.mxu0
          %1284 = vmatprep.subr.bf16.mxu0 0
          %1285 = vmatpush1.bf16.msra.mxu0 %v870
          %1286 = vmatprep.subr.bf16.mxu0 0
          %1287 = vmatpush1.bf16.msra.mxu0 %v867
          %1288 = vmatprep.subr.bf16.mxu0 0
          %1289 = vmatpush1.bf16.msra.mxu0 %v864
          %1290 = vmatprep.subr.bf16.mxu0 0
          %1291 = vmatpush1.bf16.msra.mxu0 %v861
          %1292 = vmatprep.subr.bf16.mxu0 0
          %1293 = vmatpush1.bf16.msra.mxu0 %v858
          %1294 = vmatprep.subr.bf16.mxu0 0
          %1295 = vmatpush1.bf16.msra.mxu0 %v855
          %1296 = vmatprep.subr.bf16.mxu0 0
          %1297 = vmatpush1.bf16.msra.mxu0 %v852
          %1298 = vmatprep.subr.bf16.mxu0 0
          %1299 = vmatpush1.bf16.msra.mxu0 %v849
          %1300 = vmatprep.subr.bf16.mxu0 0
          %1301 = vmatpush2.bf16.msra.mxu0 0
          %1302 = vmatprep.subr.bf16.mxu0 0
          %1303 = vmatpush2.bf16.msra.mxu0 0
          %1304 = vmatprep.subr.bf16.mxu0 0
          %1305 = vmatpush2.bf16.msra.mxu0 0
          %1306 = vmatprep.subr.bf16.mxu0 0
          %1307 = vmatpush2.bf16.msra.mxu0 0
          %1308 = vmatprep.subr.bf16.mxu0 0
          %1309 = vmatpush2.bf16.msra.mxu0 0
          %1310 = vmatprep.subr.bf16.mxu0 0
          %1311 = vmatpush2.bf16.msra.mxu0 0
          %1312 = vmatprep.subr.bf16.mxu0 0
          %1313 = vmatpush2.bf16.msra.mxu0 0
          %1314 = vmatprep.subr.bf16.mxu0 0
          %1315 = vmatpush2.bf16.msra.mxu0 0
          %1316 = vmatprep.mubr.bf16.mxu0 0
          %1317 = vmatmul.mubr.bf16.gmra.mxu0 %v1242
          %v1318 = vpop.f32.mrf.mxu0
          %v1319 = vadd.f32 %v763, %v1318
          %v1320 = vpop.f32.mrf.mxu0
          %v1321 = vpop.f32.mrf.mxu0
          %v1322 = vpop.f32.mrf.mxu0
          %1323 = vdwg.mxu0
          %v1324 = vadd.f32 %v1239, %v1278
          %v1325 = vxor.u32 %v1324, 2147483648
          %v1326 = vmul.f32 %v1325, 1.442695
          %v1327 = vpow.pop %v1326
          %v1328 = vadd.f32 %v1327, 1.0
          %v1329 = vrcp.pop %v1328
          %v1330 = vmul.f32 1.0, %v1329
          %v1331 = vadd.f32 %v1240, %v1280
          %v1332 = vxor.u32 %v1331, 2147483648
          %v1333 = vmul.f32 %v1332, 1.442695
          %v1334 = vpow.pop %v1333
          %v1335 = vadd.f32 %v1334, 1.0
          %v1336 = vrcp.pop %v1335
          %v1337 = vmul.f32 1.0, %v1336
          %v1338 = vmul.f32 %v1330, %v1319
          %v1339 = vadd.f32 %v1241, %v1338
          %v1340 = vtanh.pop %v1339
          %v1341 = vsub.f32 1.0, %v1337
          %v1342 = vmul.f32 %v1341, %v1340
          %v1343 = vmul.f32 %v1337, %v1229
          %v1344 = vadd.f32 %v1342, %v1343
          %vm1345 = vcmp.gt.s32.totalorder %v742, 3
          %v1346 = vsel %vm1345, %v1344, %v1229
          %v1347 = vsel %vm1345, %v1344, 0.0
          %v1348 = vpack.c.bf16 %v1347, %v1347
          %s1349 = scalar_lea.vmem [#allocation3], 12
          %1350 = vst [vmem:[%s1349] sm:$0xf] %v1348
          %s1351 = smul.u32 4, 3
          %s1352 = smul.addr %s1351, 4
          %s1353 = scalar_lea.vmem [#allocation2], %s1352
          %v1354 = vld [vmem:[%s1353] sm:$0xff]
          %v1355 = vld [vmem:[%s1353 + $0x8] sm:$0xf]
          %v1356 = vunpack.c.l.bf16 %v1354
          %v1357 = vunpack.c.h.bf16 %v1354
          %v1358 = vunpack.c.l.bf16 %v1355
          %v1359 = vpack.c.bf16 %v1346, %v1346
          %1360 = vmatprep.subr.bf16.mxu0 %v869
          %1361 = vmatpush1.bf16.msra.mxu0 %v868
          %1362 = vmatprep.subr.bf16.mxu0 %v866
          %1363 = vmatpush1.bf16.msra.mxu0 %v865
          %1364 = vmatprep.subr.bf16.mxu0 %v863
          %1365 = vmatpush1.bf16.msra.mxu0 %v862
          %1366 = vmatprep.subr.bf16.mxu0 %v860
          %1367 = vmatpush1.bf16.msra.mxu0 %v859
          %1368 = vmatprep.subr.bf16.mxu0 %v857
          %1369 = vmatpush1.bf16.msra.mxu0 %v856
          %1370 = vmatprep.subr.bf16.mxu0 %v854
          %1371 = vmatpush1.bf16.msra.mxu0 %v853
          %1372 = vmatprep.subr.bf16.mxu0 %v851
          %1373 = vmatpush1.bf16.msra.mxu0 %v850
          %1374 = vmatprep.subr.bf16.mxu0 %v848
          %1375 = vmatpush1.bf16.msra.mxu0 %v847
          %1376 = vmatprep.subr.bf16.mxu0 0
          %1377 = vmatpush2.bf16.msra.mxu0 0
          %1378 = vmatprep.subr.bf16.mxu0 0
          %1379 = vmatpush2.bf16.msra.mxu0 0
          %1380 = vmatprep.subr.bf16.mxu0 0
          %1381 = vmatpush2.bf16.msra.mxu0 0
          %1382 = vmatprep.subr.bf16.mxu0 0
          %1383 = vmatpush2.bf16.msra.mxu0 0
          %1384 = vmatprep.subr.bf16.mxu0 0
          %1385 = vmatpush2.bf16.msra.mxu0 0
          %1386 = vmatprep.subr.bf16.mxu0 0
          %1387 = vmatpush2.bf16.msra.mxu0 0
          %1388 = vmatprep.subr.bf16.mxu0 0
          %1389 = vmatpush2.bf16.msra.mxu0 0
          %1390 = vmatprep.subr.bf16.mxu0 0
          %1391 = vmatpush2.bf16.msra.mxu0 0
          %1392 = vmatprep.mubr.bf16.mxu0 0
          %1393 = vmatmul.mubr.bf16.gmra.mxu0 %v1359
          %v1394 = vpop.f32.mrf.mxu0
          %v1395 = vadd.f32 %v755, %v1394
          %v1396 = vpop.f32.mrf.mxu0
          %v1397 = vadd.f32 %v759, %v1396
          %v1398 = vpop.f32.mrf.mxu0
          %v1399 = vpop.f32.mrf.mxu0
          %1400 = vdwg.mxu0
          %1401 = vmatprep.subr.bf16.mxu0 0
          %1402 = vmatpush1.bf16.msra.mxu0 %v870
          %1403 = vmatprep.subr.bf16.mxu0 0
          %1404 = vmatpush1.bf16.msra.mxu0 %v867
          %1405 = vmatprep.subr.bf16.mxu0 0
          %1406 = vmatpush1.bf16.msra.mxu0 %v864
          %1407 = vmatprep.subr.bf16.mxu0 0
          %1408 = vmatpush1.bf16.msra.mxu0 %v861
          %1409 = vmatprep.subr.bf16.mxu0 0
          %1410 = vmatpush1.bf16.msra.mxu0 %v858
          %1411 = vmatprep.subr.bf16.mxu0 0
          %1412 = vmatpush1.bf16.msra.mxu0 %v855
          %1413 = vmatprep.subr.bf16.mxu0 0
          %1414 = vmatpush1.bf16.msra.mxu0 %v852
          %1415 = vmatprep.subr.bf16.mxu0 0
          %1416 = vmatpush1.bf16.msra.mxu0 %v849
          %1417 = vmatprep.subr.bf16.mxu0 0
          %1418 = vmatpush2.bf16.msra.mxu0 0
          %1419 = vmatprep.subr.bf16.mxu0 0
          %1420 = vmatpush2.bf16.msra.mxu0 0
          %1421 = vmatprep.subr.bf16.mxu0 0
          %1422 = vmatpush2.bf16.msra.mxu0 0
          %1423 = vmatprep.subr.bf16.mxu0 0
          %1424 = vmatpush2.bf16.msra.mxu0 0
          %1425 = vmatprep.subr.bf16.mxu0 0
          %1426 = vmatpush2.bf16.msra.mxu0 0
          %1427 = vmatprep.subr.bf16.mxu0 0
          %1428 = vmatpush2.bf16.msra.mxu0 0
          %1429 = vmatprep.subr.bf16.mxu0 0
          %1430 = vmatpush2.bf16.msra.mxu0 0
          %1431 = vmatprep.subr.bf16.mxu0 0
          %1432 = vmatpush2.bf16.msra.mxu0 0
          %1433 = vmatprep.mubr.bf16.mxu0 0
          %1434 = vmatmul.mubr.bf16.gmra.mxu0 %v1359
          %v1435 = vpop.f32.mrf.mxu0
          %v1436 = vadd.f32 %v763, %v1435
          %v1437 = vpop.f32.mrf.mxu0
          %v1438 = vpop.f32.mrf.mxu0
          %v1439 = vpop.f32.mrf.mxu0
          %1440 = vdwg.mxu0
          %v1441 = vadd.f32 %v1356, %v1395
          %v1442 = vxor.u32 %v1441, 2147483648
          %v1443 = vmul.f32 %v1442, 1.442695
          %v1444 = vpow.pop %v1443
          %v1445 = vadd.f32 %v1444, 1.0
          %v1446 = vrcp.pop %v1445
          %v1447 = vmul.f32 1.0, %v1446
          %v1448 = vadd.f32 %v1357, %v1397
          %v1449 = vxor.u32 %v1448, 2147483648
          %v1450 = vmul.f32 %v1449, 1.442695
          %v1451 = vpow.pop %v1450
          %v1452 = vadd.f32 %v1451, 1.0
          %v1453 = vrcp.pop %v1452
          %v1454 = vmul.f32 1.0, %v1453
          %v1455 = vmul.f32 %v1447, %v1436
          %v1456 = vadd.f32 %v1358, %v1455
          %v1457 = vtanh.pop %v1456
          %v1458 = vsub.f32 1.0, %v1454
          %v1459 = vmul.f32 %v1458, %v1457
          %v1460 = vmul.f32 %v1454, %v1346
          %v1461 = vadd.f32 %v1459, %v1460
          %vm1462 = vcmp.gt.s32.totalorder %v742, 4
          %v1463 = vsel %vm1462, %v1461, %v1346
          %v1464 = vsel %vm1462, %v1461, 0.0
          %v1465 = vpack.c.bf16 %v1464, %v1464
          %s1466 = scalar_lea.vmem [#allocation3], 16
          %1467 = vst [vmem:[%s1466] sm:$0xf] %v1465
          %s1468 = smul.u32 5, 3
          %s1469 = smul.addr %s1468, 4
          %s1470 = scalar_lea.vmem [#allocation2], %s1469
          %v1471 = vld [vmem:[%s1470] sm:$0xff]
          %v1472 = vld [vmem:[%s1470 + $0x8] sm:$0xf]
          %v1473 = vunpack.c.l.bf16 %v1471
          %v1474 = vunpack.c.h.bf16 %v1471
          %v1475 = vunpack.c.l.bf16 %v1472
          %v1476 = vpack.c.bf16 %v1463, %v1463
          %1477 = vmatprep.subr.bf16.mxu0 %v869
          %1478 = vmatpush1.bf16.msra.mxu0 %v868
          %1479 = vmatprep.subr.bf16.mxu0 %v866
          %1480 = vmatpush1.bf16.msra.mxu0 %v865
          %1481 = vmatprep.subr.bf16.mxu0 %v863
          %1482 = vmatpush1.bf16.msra.mxu0 %v862
          %1483 = vmatprep.subr.bf16.mxu0 %v860
          %1484 = vmatpush1.bf16.msra.mxu0 %v859
          %1485 = vmatprep.subr.bf16.mxu0 %v857
          %1486 = vmatpush1.bf16.msra.mxu0 %v856
          %1487 = vmatprep.subr.bf16.mxu0 %v854
          %1488 = vmatpush1.bf16.msra.mxu0 %v853
          %1489 = vmatprep.subr.bf16.mxu0 %v851
          %1490 = vmatpush1.bf16.msra.mxu0 %v850
          %1491 = vmatprep.subr.bf16.mxu0 %v848
          %1492 = vmatpush1.bf16.msra.mxu0 %v847
          %1493 = vmatprep.subr.bf16.mxu0 0
          %1494 = vmatpush2.bf16.msra.mxu0 0
          %1495 = vmatprep.subr.bf16.mxu0 0
          %1496 = vmatpush2.bf16.msra.mxu0 0
          %1497 = vmatprep.subr.bf16.mxu0 0
          %1498 = vmatpush2.bf16.msra.mxu0 0
          %1499 = vmatprep.subr.bf16.mxu0 0
          %1500 = vmatpush2.bf16.msra.mxu0 0
          %1501 = vmatprep.subr.bf16.mxu0 0
          %1502 = vmatpush2.bf16.msra.mxu0 0
          %1503 = vmatprep.subr.bf16.mxu0 0
          %1504 = vmatpush2.bf16.msra.mxu0 0
          %1505 = vmatprep.subr.bf16.mxu0 0
          %1506 = vmatpush2.bf16.msra.mxu0 0
          %1507 = vmatprep.subr.bf16.mxu0 0
          %1508 = vmatpush2.bf16.msra.mxu0 0
          %1509 = vmatprep.mubr.bf16.mxu0 0
          %1510 = vmatmul.mubr.bf16.gmra.mxu0 %v1476
          %v1511 = vpop.f32.mrf.mxu0
          %v1512 = vadd.f32 %v755, %v1511
          %v1513 = vpop.f32.mrf.mxu0
          %v1514 = vadd.f32 %v759, %v1513
          %v1515 = vpop.f32.mrf.mxu0
          %v1516 = vpop.f32.mrf.mxu0
          %1517 = vdwg.mxu0
          %1518 = vmatprep.subr.bf16.mxu0 0
          %1519 = vmatpush1.bf16.msra.mxu0 %v870
          %1520 = vmatprep.subr.bf16.mxu0 0
          %1521 = vmatpush1.bf16.msra.mxu0 %v867
          %1522 = vmatprep.subr.bf16.mxu0 0
          %1523 = vmatpush1.bf16.msra.mxu0 %v864
          %1524 = vmatprep.subr.bf16.mxu0 0
          %1525 = vmatpush1.bf16.msra.mxu0 %v861
          %1526 = vmatprep.subr.bf16.mxu0 0
          %1527 = vmatpush1.bf16.msra.mxu0 %v858
          %1528 = vmatprep.subr.bf16.mxu0 0
          %1529 = vmatpush1.bf16.msra.mxu0 %v855
          %1530 = vmatprep.subr.bf16.mxu0 0
          %1531 = vmatpush1.bf16.msra.mxu0 %v852
          %1532 = vmatprep.subr.bf16.mxu0 0
          %1533 = vmatpush1.bf16.msra.mxu0 %v849
          %1534 = vmatprep.subr.bf16.mxu0 0
          %1535 = vmatpush2.bf16.msra.mxu0 0
          %1536 = vmatprep.subr.bf16.mxu0 0
          %1537 = vmatpush2.bf16.msra.mxu0 0
          %1538 = vmatprep.subr.bf16.mxu0 0
          %1539 = vmatpush2.bf16.msra.mxu0 0
          %1540 = vmatprep.subr.bf16.mxu0 0
          %1541 = vmatpush2.bf16.msra.mxu0 0
          %1542 = vmatprep.subr.bf16.mxu0 0
          %1543 = vmatpush2.bf16.msra.mxu0 0
          %1544 = vmatprep.subr.bf16.mxu0 0
          %1545 = vmatpush2.bf16.msra.mxu0 0
          %1546 = vmatprep.subr.bf16.mxu0 0
          %1547 = vmatpush2.bf16.msra.mxu0 0
          %1548 = vmatprep.subr.bf16.mxu0 0
          %1549 = vmatpush2.bf16.msra.mxu0 0
          %1550 = vmatprep.mubr.bf16.mxu0 0
          %1551 = vmatmul.mubr.bf16.gmra.mxu0 %v1476
          %v1552 = vpop.f32.mrf.mxu0
          %v1553 = vadd.f32 %v763, %v1552
          %v1554 = vpop.f32.mrf.mxu0
          %v1555 = vpop.f32.mrf.mxu0
          %v1556 = vpop.f32.mrf.mxu0
          %1557 = vdwg.mxu0
          %v1558 = vadd.f32 %v1473, %v1512
          %v1559 = vxor.u32 %v1558, 2147483648
          %v1560 = vmul.f32 %v1559, 1.442695
          %v1561 = vpow.pop %v1560
          %v1562 = vadd.f32 %v1561, 1.0
          %v1563 = vrcp.pop %v1562
          %v1564 = vmul.f32 1.0, %v1563
          %v1565 = vadd.f32 %v1474, %v1514
          %v1566 = vxor.u32 %v1565, 2147483648
          %v1567 = vmul.f32 %v1566, 1.442695
          %v1568 = vpow.pop %v1567
          %v1569 = vadd.f32 %v1568, 1.0
          %v1570 = vrcp.pop %v1569
          %v1571 = vmul.f32 1.0, %v1570
          %v1572 = vmul.f32 %v1564, %v1553
          %v1573 = vadd.f32 %v1475, %v1572
          %v1574 = vtanh.pop %v1573
          %v1575 = vsub.f32 1.0, %v1571
          %v1576 = vmul.f32 %v1575, %v1574
          %v1577 = vmul.f32 %v1571, %v1463
          %v1578 = vadd.f32 %v1576, %v1577
          %vm1579 = vcmp.gt.s32.totalorder %v742, 5
          %v1580 = vsel %vm1579, %v1578, %v1463
          %v1581 = vsel %vm1579, %v1578, 0.0
          %v1582 = vpack.c.bf16 %v1581, %v1581
          %s1583 = scalar_lea.vmem [#allocation3], 20
          %1584 = vst [vmem:[%s1583] sm:$0xf] %v1582
          %s1585 = smul.u32 6, 3
          %s1586 = smul.addr %s1585, 4
          %s1587 = scalar_lea.vmem [#allocation2], %s1586
          %v1588 = vld [vmem:[%s1587] sm:$0xff]
          %v1589 = vld [vmem:[%s1587 + $0x8] sm:$0xf]
          %v1590 = vunpack.c.l.bf16 %v1588
          %v1591 = vunpack.c.h.bf16 %v1588
          %v1592 = vunpack.c.l.bf16 %v1589
          %v1593 = vpack.c.bf16 %v1580, %v1580
          %1594 = vmatprep.subr.bf16.mxu0 %v869
          %1595 = vmatpush1.bf16.msra.mxu0 %v868
          %1596 = vmatprep.subr.bf16.mxu0 %v866
          %1597 = vmatpush1.bf16.msra.mxu0 %v865
          %1598 = vmatprep.subr.bf16.mxu0 %v863
          %1599 = vmatpush1.bf16.msra.mxu0 %v862
          %1600 = vmatprep.subr.bf16.mxu0 %v860
          %1601 = vmatpush1.bf16.msra.mxu0 %v859
          %1602 = vmatprep.subr.bf16.mxu0 %v857
          %1603 = vmatpush1.bf16.msra.mxu0 %v856
          %1604 = vmatprep.subr.bf16.mxu0 %v854
          %1605 = vmatpush1.bf16.msra.mxu0 %v853
          %1606 = vmatprep.subr.bf16.mxu0 %v851
          %1607 = vmatpush1.bf16.msra.mxu0 %v850
          %1608 = vmatprep.subr.bf16.mxu0 %v848
          %1609 = vmatpush1.bf16.msra.mxu0 %v847
          %1610 = vmatprep.subr.bf16.mxu0 0
          %1611 = vmatpush2.bf16.msra.mxu0 0
          %1612 = vmatprep.subr.bf16.mxu0 0
          %1613 = vmatpush2.bf16.msra.mxu0 0
          %1614 = vmatprep.subr.bf16.mxu0 0
          %1615 = vmatpush2.bf16.msra.mxu0 0
          %1616 = vmatprep.subr.bf16.mxu0 0
          %1617 = vmatpush2.bf16.msra.mxu0 0
          %1618 = vmatprep.subr.bf16.mxu0 0
          %1619 = vmatpush2.bf16.msra.mxu0 0
          %1620 = vmatprep.subr.bf16.mxu0 0
          %1621 = vmatpush2.bf16.msra.mxu0 0
          %1622 = vmatprep.subr.bf16.mxu0 0
          %1623 = vmatpush2.bf16.msra.mxu0 0
          %1624 = vmatprep.subr.bf16.mxu0 0
          %1625 = vmatpush2.bf16.msra.mxu0 0
          %1626 = vmatprep.mubr.bf16.mxu0 0
          %1627 = vmatmul.mubr.bf16.gmra.mxu0 %v1593
          %v1628 = vpop.f32.mrf.mxu0
          %v1629 = vadd.f32 %v755, %v1628
          %v1630 = vpop.f32.mrf.mxu0
          %v1631 = vadd.f32 %v759, %v1630
          %v1632 = vpop.f32.mrf.mxu0
          %v1633 = vpop.f32.mrf.mxu0
          %1634 = vdwg.mxu0
          %1635 = vmatprep.subr.bf16.mxu0 0
          %1636 = vmatpush1.bf16.msra.mxu0 %v870
          %1637 = vmatprep.subr.bf16.mxu0 0
          %1638 = vmatpush1.bf16.msra.mxu0 %v867
          %1639 = vmatprep.subr.bf16.mxu0 0
          %1640 = vmatpush1.bf16.msra.mxu0 %v864
          %1641 = vmatprep.subr.bf16.mxu0 0
          %1642 = vmatpush1.bf16.msra.mxu0 %v861
          %1643 = vmatprep.subr.bf16.mxu0 0
          %1644 = vmatpush1.bf16.msra.mxu0 %v858
          %1645 = vmatprep.subr.bf16.mxu0 0
          %1646 = vmatpush1.bf16.msra.mxu0 %v855
          %1647 = vmatprep.subr.bf16.mxu0 0
          %1648 = vmatpush1.bf16.msra.mxu0 %v852
          %1649 = vmatprep.subr.bf16.mxu0 0
          %1650 = vmatpush1.bf16.msra.mxu0 %v849
          %1651 = vmatprep.subr.bf16.mxu0 0
          %1652 = vmatpush2.bf16.msra.mxu0 0
          %1653 = vmatprep.subr.bf16.mxu0 0
          %1654 = vmatpush2.bf16.msra.mxu0 0
          %1655 = vmatprep.subr.bf16.mxu0 0
          %1656 = vmatpush2.bf16.msra.mxu0 0
          %1657 = vmatprep.subr.bf16.mxu0 0
          %1658 = vmatpush2.bf16.msra.mxu0 0
          %1659 = vmatprep.subr.bf16.mxu0 0
          %1660 = vmatpush2.bf16.msra.mxu0 0
          %1661 = vmatprep.subr.bf16.mxu0 0
          %1662 = vmatpush2.bf16.msra.mxu0 0
          %1663 = vmatprep.subr.bf16.mxu0 0
          %1664 = vmatpush2.bf16.msra.mxu0 0
          %1665 = vmatprep.subr.bf16.mxu0 0
          %1666 = vmatpush2.bf16.msra.mxu0 0
          %1667 = vmatprep.mubr.bf16.mxu0 0
          %1668 = vmatmul.mubr.bf16.gmra.mxu0 %v1593
          %v1669 = vpop.f32.mrf.mxu0
          %v1670 = vadd.f32 %v763, %v1669
          %v1671 = vpop.f32.mrf.mxu0
          %v1672 = vpop.f32.mrf.mxu0
          %v1673 = vpop.f32.mrf.mxu0
          %1674 = vdwg.mxu0
          %v1675 = vadd.f32 %v1590, %v1629
          %v1676 = vxor.u32 %v1675, 2147483648
          %v1677 = vmul.f32 %v1676, 1.442695
          %v1678 = vpow.pop %v1677
          %v1679 = vadd.f32 %v1678, 1.0
          %v1680 = vrcp.pop %v1679
          %v1681 = vmul.f32 1.0, %v1680
          %v1682 = vadd.f32 %v1591, %v1631
          %v1683 = vxor.u32 %v1682, 2147483648
          %v1684 = vmul.f32 %v1683, 1.442695
          %v1685 = vpow.pop %v1684
          %v1686 = vadd.f32 %v1685, 1.0
          %v1687 = vrcp.pop %v1686
          %v1688 = vmul.f32 1.0, %v1687
          %v1689 = vmul.f32 %v1681, %v1670
          %v1690 = vadd.f32 %v1592, %v1689
          %v1691 = vtanh.pop %v1690
          %v1692 = vsub.f32 1.0, %v1688
          %v1693 = vmul.f32 %v1692, %v1691
          %v1694 = vmul.f32 %v1688, %v1580
          %v1695 = vadd.f32 %v1693, %v1694
          %vm1696 = vcmp.gt.s32.totalorder %v742, 6
          %v1697 = vsel %vm1696, %v1695, %v1580
          %v1698 = vsel %vm1696, %v1695, 0.0
          %v1699 = vpack.c.bf16 %v1698, %v1698
          %s1700 = scalar_lea.vmem [#allocation3], 24
          %1701 = vst [vmem:[%s1700] sm:$0xf] %v1699
          %s1702 = smul.u32 7, 3
          %s1703 = smul.addr %s1702, 4
          %s1704 = scalar_lea.vmem [#allocation2], %s1703
          %v1705 = vld [vmem:[%s1704] sm:$0xff]
          %v1706 = vld [vmem:[%s1704 + $0x8] sm:$0xf]
          %v1707 = vunpack.c.l.bf16 %v1705
          %v1708 = vunpack.c.h.bf16 %v1705
          %v1709 = vunpack.c.l.bf16 %v1706
          %v1710 = vpack.c.bf16 %v1697, %v1697
          %1711 = vmatprep.subr.bf16.mxu0 %v869
          %1712 = vmatpush1.bf16.msra.mxu0 %v868
          %1713 = vmatprep.subr.bf16.mxu0 %v866
          %1714 = vmatpush1.bf16.msra.mxu0 %v865
          %1715 = vmatprep.subr.bf16.mxu0 %v863
          %1716 = vmatpush1.bf16.msra.mxu0 %v862
          %1717 = vmatprep.subr.bf16.mxu0 %v860
          %1718 = vmatpush1.bf16.msra.mxu0 %v859
          %1719 = vmatprep.subr.bf16.mxu0 %v857
          %1720 = vmatpush1.bf16.msra.mxu0 %v856
          %1721 = vmatprep.subr.bf16.mxu0 %v854
          %1722 = vmatpush1.bf16.msra.mxu0 %v853
          %1723 = vmatprep.subr.bf16.mxu0 %v851
          %1724 = vmatpush1.bf16.msra.mxu0 %v850
          %1725 = vmatprep.subr.bf16.mxu0 %v848
          %1726 = vmatpush1.bf16.msra.mxu0 %v847
          %1727 = vmatprep.subr.bf16.mxu0 0
          %1728 = vmatpush2.bf16.msra.mxu0 0
          %1729 = vmatprep.subr.bf16.mxu0 0
          %1730 = vmatpush2.bf16.msra.mxu0 0
          %1731 = vmatprep.subr.bf16.mxu0 0
          %1732 = vmatpush2.bf16.msra.mxu0 0
          %1733 = vmatprep.subr.bf16.mxu0 0
          %1734 = vmatpush2.bf16.msra.mxu0 0
          %1735 = vmatprep.subr.bf16.mxu0 0
          %1736 = vmatpush2.bf16.msra.mxu0 0
          %1737 = vmatprep.subr.bf16.mxu0 0
          %1738 = vmatpush2.bf16.msra.mxu0 0
          %1739 = vmatprep.subr.bf16.mxu0 0
          %1740 = vmatpush2.bf16.msra.mxu0 0
          %1741 = vmatprep.subr.bf16.mxu0 0
          %1742 = vmatpush2.bf16.msra.mxu0 0
          %1743 = vmatprep.mubr.bf16.mxu0 0
          %1744 = vmatmul.mubr.bf16.gmra.mxu0 %v1710
          %v1745 = vpop.f32.mrf.mxu0
          %v1746 = vadd.f32 %v755, %v1745
          %v1747 = vpop.f32.mrf.mxu0
          %v1748 = vadd.f32 %v759, %v1747
          %v1749 = vpop.f32.mrf.mxu0
          %v1750 = vpop.f32.mrf.mxu0
          %1751 = vdwg.mxu0
          %1752 = vmatprep.subr.bf16.mxu0 0
          %1753 = vmatpush1.bf16.msra.mxu0 %v870
          %1754 = vmatprep.subr.bf16.mxu0 0
          %1755 = vmatpush1.bf16.msra.mxu0 %v867
          %1756 = vmatprep.subr.bf16.mxu0 0
          %1757 = vmatpush1.bf16.msra.mxu0 %v864
          %1758 = vmatprep.subr.bf16.mxu0 0
          %1759 = vmatpush1.bf16.msra.mxu0 %v861
          %1760 = vmatprep.subr.bf16.mxu0 0
          %1761 = vmatpush1.bf16.msra.mxu0 %v858
          %1762 = vmatprep.subr.bf16.mxu0 0
          %1763 = vmatpush1.bf16.msra.mxu0 %v855
          %1764 = vmatprep.subr.bf16.mxu0 0
          %1765 = vmatpush1.bf16.msra.mxu0 %v852
          %1766 = vmatprep.subr.bf16.mxu0 0
          %1767 = vmatpush1.bf16.msra.mxu0 %v849
          %1768 = vmatprep.subr.bf16.mxu0 0
          %1769 = vmatpush2.bf16.msra.mxu0 0
          %1770 = vmatprep.subr.bf16.mxu0 0
          %1771 = vmatpush2.bf16.msra.mxu0 0
          %1772 = vmatprep.subr.bf16.mxu0 0
          %1773 = vmatpush2.bf16.msra.mxu0 0
          %1774 = vmatprep.subr.bf16.mxu0 0
          %1775 = vmatpush2.bf16.msra.mxu0 0
          %1776 = vmatprep.subr.bf16.mxu0 0
          %1777 = vmatpush2.bf16.msra.mxu0 0
          %1778 = vmatprep.subr.bf16.mxu0 0
          %1779 = vmatpush2.bf16.msra.mxu0 0
          %1780 = vmatprep.subr.bf16.mxu0 0
          %1781 = vmatpush2.bf16.msra.mxu0 0
          %1782 = vmatprep.subr.bf16.mxu0 0
          %1783 = vmatpush2.bf16.msra.mxu0 0
          %1784 = vmatprep.mubr.bf16.mxu0 0
          %1785 = vmatmul.mubr.bf16.gmra.mxu0 %v1710
          %v1786 = vpop.f32.mrf.mxu0
          %v1787 = vadd.f32 %v763, %v1786
          %v1788 = vpop.f32.mrf.mxu0
          %v1789 = vpop.f32.mrf.mxu0
          %v1790 = vpop.f32.mrf.mxu0
          %1791 = vdwg.mxu0
          %v1792 = vadd.f32 %v1707, %v1746
          %v1793 = vxor.u32 %v1792, 2147483648
          %v1794 = vmul.f32 %v1793, 1.442695
          %v1795 = vpow.pop %v1794
          %v1796 = vadd.f32 %v1795, 1.0
          %v1797 = vrcp.pop %v1796
          %v1798 = vmul.f32 1.0, %v1797
          %v1799 = vadd.f32 %v1708, %v1748
          %v1800 = vxor.u32 %v1799, 2147483648
          %v1801 = vmul.f32 %v1800, 1.442695
          %v1802 = vpow.pop %v1801
          %v1803 = vadd.f32 %v1802, 1.0
          %v1804 = vrcp.pop %v1803
          %v1805 = vmul.f32 1.0, %v1804
          %v1806 = vmul.f32 %v1798, %v1787
          %v1807 = vadd.f32 %v1709, %v1806
          %v1808 = vtanh.pop %v1807
          %v1809 = vsub.f32 1.0, %v1805
          %v1810 = vmul.f32 %v1809, %v1808
          %v1811 = vmul.f32 %v1805, %v1697
          %v1812 = vadd.f32 %v1810, %v1811
          %vm1813 = vcmp.gt.s32.totalorder %v742, 7
          %v1814 = vsel %vm1813, %v1812, %v1697
          %v1815 = vsel %vm1813, %v1812, 0.0
          %v1816 = vpack.c.bf16 %v1815, %v1815
          %s1817 = scalar_lea.vmem [#allocation3], 28
          %1818 = vst [vmem:[%s1817] sm:$0xf] %v1816
          %1819 = vst [vmem:[#allocation11] sm:$0xff] %v1814
        $region72: #{tpu_custom_call.1} parent=55 // pred_fallthru
          _
        %s1820 = smul.u32 %s28, 32
        %s1821 = sshra.s32 %s1820, 3
        %s1822 = sand.u32 %s1820, 7
        %s1823 = smul.addr %s1821, 4
        %s1824 = scalar_lea.vmem [#allocation3], %s1823
        %v1825 = vld [vmem:[%s1824] sm:$0xf]
        %v1826 = vld [vmem:[%s1824 + $0x4] sm:$0xf]
        %v1827 = vld [vmem:[%s1824 + $0x8] sm:$0xf]
        %v1828 = vld [vmem:[%s1824 + $0xc] sm:$0xf]
        %v1829 = vld [vmem:[#allocation7] sm:$0xf]
        %v1830 = vld [vmem:[#allocation7 + $0x4] sm:$0xf]
        %v1831 = vld [vmem:[#allocation7 + $0x8] sm:$0xf]
        %v1832 = vld [vmem:[#allocation7 + $0xc] sm:$0xf]
        %v1833 = vld [vmem:[#allocation7 + $0x10] sm:$0xf]
        %v1834 = vld [vmem:[#allocation7 + $0x14] sm:$0xf]
        %v1835 = vld [vmem:[#allocation7 + $0x18] sm:$0xf]
        %v1836 = vld [vmem:[#allocation7 + $0x1c] sm:$0xf]
        %v1837 = vld [vmem:[#allocation7 + $0x20] sm:$0xf]
        %v1838 = vld [vmem:[#allocation7 + $0x24] sm:$0xf]
        %v1839 = vld [vmem:[#allocation7 + $0x28] sm:$0xf]
        %v1840 = vld [vmem:[#allocation7 + $0x2c] sm:$0xf]
        %v1841 = vld [vmem:[#allocation7 + $0x30] sm:$0xf]
        %v1842 = vld [vmem:[#allocation7 + $0x34] sm:$0xf]
        %v1843 = vld [vmem:[#allocation7 + $0x38] sm:$0xf]
        %v1844 = vld [vmem:[#allocation7 + $0x3c] sm:$0xf]
        %v1845 = vld [vmem:[%s7] sm:$0x1]
        %v1847 = vlaneseq
        %v1848 = vshrl.u32 %v1847, 7
        %v1849 = vsub.s32 0, %v1848
        %v1850 = vrot.slane %v1845, %v1849
        %v1856 = vunpack.c.l.b16 %v1825
        %v1857 = vunpack.c.l.b16 %v1826
        %v1858 = vunpack.c.l.b16 %v1827
        %v1859 = vunpack.c.l.b16 %v1828
        %v1860 = vpack.c.b16 %v1857, %v1856
        %v1861 = vpack.c.b16 %v1859, %v1858
        %v1880 = vunpack.c.l.b16 %v1829
        %v1881 = vunpack.c.l.b16 %v1830
        %v1882 = vunpack.c.l.b16 %v1831
        %v1883 = vunpack.c.l.b16 %v1832
        %v1884 = vunpack.c.l.b16 %v1833
        %v1885 = vunpack.c.l.b16 %v1834
        %v1886 = vunpack.c.l.b16 %v1835
        %v1887 = vunpack.c.l.b16 %v1836
        %v1888 = vunpack.c.l.b16 %v1837
        %v1889 = vunpack.c.l.b16 %v1838
        %v1890 = vunpack.c.l.b16 %v1839
        %v1891 = vunpack.c.l.b16 %v1840
        %v1892 = vunpack.c.l.b16 %v1841
        %v1893 = vunpack.c.l.b16 %v1842
        %v1894 = vunpack.c.l.b16 %v1843
        %v1895 = vunpack.c.l.b16 %v1844
        %v1896 = vpack.c.b16 %v1881, %v1880
        %v1897 = vpack.c.b16 %v1883, %v1882
        %v1898 = vpack.c.b16 %v1885, %v1884
        %v1899 = vpack.c.b16 %v1887, %v1886
        %v1900 = vpack.c.b16 %v1889, %v1888
        %v1901 = vpack.c.b16 %v1891, %v1890
        %v1902 = vpack.c.b16 %v1893, %v1892
        %v1903 = vpack.c.b16 %v1895, %v1894
        %1912 = vmatprep.subr.bf16.mxu0 0
        %1913 = vmatpush1.bf16.msra.mxu0 %v1903
        %1914 = vmatprep.subr.bf16.mxu0 0
        %1915 = vmatpush1.bf16.msra.mxu0 %v1902
        %1916 = vmatprep.subr.bf16.mxu0 0
        %1917 = vmatpush1.bf16.msra.mxu0 %v1901
        %1918 = vmatprep.subr.bf16.mxu0 0
        %1919 = vmatpush1.bf16.msra.mxu0 %v1900
        %1920 = vmatprep.subr.bf16.mxu0 0
        %1921 = vmatpush1.bf16.msra.mxu0 %v1899
        %1922 = vmatprep.subr.bf16.mxu0 0
        %1923 = vmatpush1.bf16.msra.mxu0 %v1898
        %1924 = vmatprep.subr.bf16.mxu0 0
        %1925 = vmatpush1.bf16.msra.mxu0 %v1897
        %1926 = vmatprep.subr.bf16.mxu0 0
        %1927 = vmatpush1.bf16.msra.mxu0 %v1896
        %1928 = vmatprep.subr.bf16.mxu0 0
        %1929 = vmatpush2.bf16.msra.mxu0 0
        %1930 = vmatprep.subr.bf16.mxu0 0
        %1931 = vmatpush2.bf16.msra.mxu0 0
        %1932 = vmatprep.subr.bf16.mxu0 0
        %1933 = vmatpush2.bf16.msra.mxu0 0
        %1934 = vmatprep.subr.bf16.mxu0 0
        %1935 = vmatpush2.bf16.msra.mxu0 0
        %1936 = vmatprep.subr.bf16.mxu0 0
        %1937 = vmatpush2.bf16.msra.mxu0 0
        %1938 = vmatprep.subr.bf16.mxu0 0
        %1939 = vmatpush2.bf16.msra.mxu0 0
        %1940 = vmatprep.subr.bf16.mxu0 0
        %1941 = vmatpush2.bf16.msra.mxu0 0
        %1942 = vmatprep.subr.bf16.mxu0 0
        %1943 = vmatpush2.bf16.msra.mxu0 0
        %1944 = vmatprep.mubr.bf16.mxu0 0
        %1945 = vmatmul.mubr.bf16.gmra.mxu0 %v1860
        %v1946 = vpop.f32.mrf.mxu0
        %v1947 = vadd.f32 %v1850, %v1946
        %v1948 = vpop.f32.mrf.mxu0
        %v1949 = vpop.f32.mrf.mxu0
        %v1950 = vadd.f32 %v1850, %v1949
        %v1951 = vpop.f32.mrf.mxu0
        %1952 = vmatprep.mubr.bf16.mxu0 0
        %1953 = vmatmul.mubr.bf16.gmra.mxu0 %v1861
        %v1954 = vpop.f32.mrf.mxu0
        %v1955 = vadd.f32 %v1850, %v1954
        %v1956 = vpop.f32.mrf.mxu0
        %v1957 = vpop.f32.mrf.mxu0
        %v1958 = vadd.f32 %v1850, %v1957
        %v1959 = vpop.f32.mrf.mxu0
        %1960 = vdwg.mxu0
        %v1961 = vtanh.pop %v1947
        %v1962 = vtanh.pop %v1950
        %v1963 = vtanh.pop %v1955
        %v1964 = vtanh.pop %v1958
        %v1965 = vpack.c.bf16 %v1962, %v1961
        %v1966 = vpack.c.bf16 %v1964, %v1963
        %v1967 = vld [vmem:[#allocation9] sm:$0xf]
        %v1968 = vld [vmem:[#allocation9 + $0x4] sm:$0xf]
        %v1969 = vld [vmem:[#allocation9 + $0x8] sm:$0xf]
        %v1970 = vld [vmem:[#allocation9 + $0xc] sm:$0xf]
        %v1971 = vld [vmem:[#allocation9 + $0x10] sm:$0xf]
        %v1972 = vld [vmem:[#allocation9 + $0x14] sm:$0xf]
        %v1973 = vld [vmem:[#allocation9 + $0x18] sm:$0xf]
        %v1974 = vld [vmem:[#allocation9 + $0x1c] sm:$0xf]
        %v1975 = vld [vmem:[#allocation9 + $0x20] sm:$0xf]
        %v1976 = vld [vmem:[#allocation9 + $0x24] sm:$0xf]
        %v1977 = vld [vmem:[#allocation9 + $0x28] sm:$0xf]
        %v1978 = vld [vmem:[#allocation9 + $0x2c] sm:$0xf]
        %v1979 = vld [vmem:[#allocation9 + $0x30] sm:$0xf]
        %v1980 = vld [vmem:[#allocation9 + $0x34] sm:$0xf]
        %v1981 = vld [vmem:[#allocation9 + $0x38] sm:$0xf]
        %v1982 = vld [vmem:[#allocation9 + $0x3c] sm:$0xf]
        %v1999 = vunpack.c.l.b16 %v1967
        %v2000 = vunpack.c.l.b16 %v1968
        %v2001 = vunpack.c.l.b16 %v1969
        %v2002 = vunpack.c.l.b16 %v1970
        %v2003 = vunpack.c.l.b16 %v1971
        %v2004 = vunpack.c.l.b16 %v1972
        %v2005 = vunpack.c.l.b16 %v1973
        %v2006 = vunpack.c.l.b16 %v1974
        %v2007 = vunpack.c.l.b16 %v1975
        %v2008 = vunpack.c.l.b16 %v1976
        %v2009 = vunpack.c.l.b16 %v1977
        %v2010 = vunpack.c.l.b16 %v1978
        %v2011 = vunpack.c.l.b16 %v1979
        %v2012 = vunpack.c.l.b16 %v1980
        %v2013 = vunpack.c.l.b16 %v1981
        %v2014 = vunpack.c.l.b16 %v1982
        %v2015 = vpack.c.b16 %v2000, %v1999
        %v2016 = vpack.c.b16 %v2002, %v2001
        %v2017 = vpack.c.b16 %v2004, %v2003
        %v2018 = vpack.c.b16 %v2006, %v2005
        %v2019 = vpack.c.b16 %v2008, %v2007
        %v2020 = vpack.c.b16 %v2010, %v2009
        %v2021 = vpack.c.b16 %v2012, %v2011
        %v2022 = vpack.c.b16 %v2014, %v2013
        %2031 = vmatprep.subr.bf16.mxu0 0
        %2032 = vmatpush1.bf16.msra.mxu0 %v2022
        %2033 = vmatprep.subr.bf16.mxu0 0
        %2034 = vmatpush1.bf16.msra.mxu0 %v2021
        %2035 = vmatprep.subr.bf16.mxu0 0
        %2036 = vmatpush1.bf16.msra.mxu0 %v2020
        %2037 = vmatprep.subr.bf16.mxu0 0
        %2038 = vmatpush1.bf16.msra.mxu0 %v2019
        %2039 = vmatprep.subr.bf16.mxu0 0
        %2040 = vmatpush1.bf16.msra.mxu0 %v2018
        %2041 = vmatprep.subr.bf16.mxu0 0
        %2042 = vmatpush1.bf16.msra.mxu0 %v2017
        %2043 = vmatprep.subr.bf16.mxu0 0
        %2044 = vmatpush1.bf16.msra.mxu0 %v2016
        %2045 = vmatprep.subr.bf16.mxu0 0
        %2046 = vmatpush1.bf16.msra.mxu0 %v2015
        %2047 = vmatprep.subr.bf16.mxu0 0
        %2048 = vmatpush2.bf16.msra.mxu0 0
        %2049 = vmatprep.subr.bf16.mxu0 0
        %2050 = vmatpush2.bf16.msra.mxu0 0
        %2051 = vmatprep.subr.bf16.mxu0 0
        %2052 = vmatpush2.bf16.msra.mxu0 0
        %2053 = vmatprep.subr.bf16.mxu0 0
        %2054 = vmatpush2.bf16.msra.mxu0 0
        %2055 = vmatprep.subr.bf16.mxu0 0
        %2056 = vmatpush2.bf16.msra.mxu0 0
        %2057 = vmatprep.subr.bf16.mxu0 0
        %2058 = vmatpush2.bf16.msra.mxu0 0
        %2059 = vmatprep.subr.bf16.mxu0 0
        %2060 = vmatpush2.bf16.msra.mxu0 0
        %2061 = vmatprep.subr.bf16.mxu0 0
        %2062 = vmatpush2.bf16.msra.mxu0 0
        %2063 = vmatprep.mubr.bf16.mxu0 0
        %2064 = vmatmul.mubr.bf16.gmra.mxu0 %v1965
        %v2065 = vpop.f32.mrf.mxu0
        %v2066 = vadd.f32 0.0, %v2065
        %v2067 = vpop.f32.mrf.mxu0
        %v2068 = vpop.f32.mrf.mxu0
        %v2069 = vadd.f32 0.0, %v2068
        %v2070 = vpop.f32.mrf.mxu0
        %2071 = vmatprep.mubr.bf16.mxu0 0
        %2072 = vmatmul.mubr.bf16.gmra.mxu0 %v1966
        %v2073 = vpop.f32.mrf.mxu0
        %v2074 = vadd.f32 0.0, %v2073
        %v2075 = vpop.f32.mrf.mxu0
        %v2076 = vpop.f32.mrf.mxu0
        %v2077 = vadd.f32 0.0, %v2076
        %v2078 = vpop.f32.mrf.mxu0
        %2079 = vdwg.mxu0
        %2080 = vst [vmem:[%s378] sm:$0xff] %v2066
        %2081 = vst [vmem:[%s378 + $0x8] sm:$0xff] %v2069
        %2082 = vst [vmem:[%s378 + $0x10] sm:$0xff] %v2074
        %2083 = vst [vmem:[%s378 + $0x18] sm:$0xff] %v2077
        %s2084 = sand.u32 %s225, 1
        %s2085 = scalar_lea.sflag [#allocation6], %s2084
        %s2086 = sand.u32 %s225, 1
        %s2087 = smul.addr %s2086, 32
        %s2088 = scalar_lea.vmem [#allocation10], %s2087
        // Predicated region
        $region73: #{tpu_custom_call.1} parent=55 // pred_check
          %p2089 = pneg %p235
        $region74: #{tpu_custom_call.1} parent=55 // pred_check_branch
          %2091 = sbr.rel (%p2089) target = $region76
        $region75: #{tpu_custom_call.1} parent=55 // pred_region
          %s2092 = smul.u32 4, %s28
          %s2094 = ssub.s32 512, 512
          %2095 = vsyncadd %s2085, %s2094
          %s2096 = smul.addr %s2092, 128
          %s2097 = scalar_lea.hbm %s9, %s2096
          %s2098 = sshll.u32 %s2088, 4
          %s2099 = int_to_ptr.vmem [resolvable:$true] %s2098
          %2104 = dma.vmem_to_hbm [thread:$0]  %s2099, 512, %s2097, %s2085, 128, 128, 8
        $region76: #{tpu_custom_call.1} parent=55 // pred_fallthru
          _
        // Predicated region
        $region77: #{tpu_custom_call.1} parent=55 // pred_check
          %p2105 = pneg %p256
        $region78: #{tpu_custom_call.1} parent=55 // pred_check_branch
          %2107 = sbr.rel (%p2105) target = $region80
        $region79: #{tpu_custom_call.1} parent=55 // pred_region
          %s2109 = ssub.s32 128, 128
          %2110 = vsyncadd [#allocation12], %s2109
          %s2112 = sshll.u32 [#allocation11], 4
          %s2113 = int_to_ptr.vmem [resolvable:$true] %s2112
          %2115 = dma.vmem_to_hbm [thread:$0]  %s2113, 128, %s10, [#allocation12]
        $region80: #{tpu_custom_call.1} parent=55 // pred_fallthru
          _
        // Predicated region
        $region81: #{tpu_custom_call.1} parent=55 // pred_check
          %p2116 = pneg %p256
        $region82: #{tpu_custom_call.1} parent=55 // pred_check_branch
          %2118 = sbr.rel (%p2116) target = $region84
        $region83: #{tpu_custom_call.1} parent=55 // pred_region
          %2119 = dma.done [#allocation12], 128
        $region84: #{tpu_custom_call.1} parent=55 // pred_fallthru
          _
      $region56: #{tpu_custom_call.1} parent=5 // pred_fallthru
        _
      %p2120 = scmp.le.s32.totalorder 2, %s23
      // Predicated region
      $region85: #{tpu_custom_call.1} parent=5 // pred_check
        %p2121 = pneg %p2120
      $region86: #{tpu_custom_call.1} parent=5 // pred_check_branch
        %2123 = sbr.rel (%p2121) target = $region88
      $region87: #{tpu_custom_call.1} parent=5 // pred_region
        %s2124 = ssub.s32 %s23, 2
        // Predicated region
        $region89: #{tpu_custom_call.1} parent=87 // pred_check
          %p2125 = pneg %p241
        $region90: #{tpu_custom_call.1} parent=87 // pred_check_branch
          %2127 = sbr.rel (%p2125) target = $region92
        $region91: #{tpu_custom_call.1} parent=87 // pred_region
          %s2128 = sand.u32 %s226, 1
          %s2129 = scalar_lea.sflag [#allocation6], %s2128
          %s2130 = sand.u32 %s226, 1
          %s2131 = smul.addr %s2130, 32
          %s2132 = scalar_lea.vmem [#allocation10], %s2131
          %2133 = dma.done %s2129, 512
        $region92: #{tpu_custom_call.1} parent=87 // pred_fallthru
          _
      $region88: #{tpu_custom_call.1} parent=5 // pred_fallthru
        _
    $region6: #{tpu_custom_call.1} parent=1 // loop_footer
      %s27 = sadd.s32 1, %s23
    $region7: #{tpu_custom_call.1} parent=1 // loop_footer_branch
      %22 = sbr.rel target = $region3
    $region8: #{tpu_custom_call.1} parent=1 // loop_exit
      _
    %2134 = vsyncpa [#allocation5], 1
    %s2135 = scalar_lea.sflag [#allocation5], 1
    %2136 = vsyncpa %s2135, 1
    %2137 = vsyncpa [#allocation8], 1
    %2138 = vsyncpa [#allocation6], 1
    %s2139 = scalar_lea.sflag [#allocation6], 1
    %2140 = vsyncpa %s2139, 1
    %2141 = vsyncpa [#allocation12], 1

</llo_original>
